<compile_context>
chip_gen: v5e
topology: v5e:2x2
jax: 0.10.0
libtpu: 0.0.40
codegen_flags: <defaults>
</compile_context>

<pallas_src>
import functools
import numpy as np
import jax
import jax.numpy as jnp
from jax.experimental import pallas as pl
from jax.experimental.pallas import tpu as pltpu


# ----------------------------------------------------------------------------
# Kernel: one full encoder block for one batch sample per grid step.
# Layout: activations are (C, H*W) -> C on sublanes, flattened HW on lanes.
# ----------------------------------------------------------------------------
def _encoder_block_kernel(x_ref, p_ref, w1_ref, b1_ref, w2_ref, b2_ref,
                          wa1m_ref, wa1s_ref, ba1_ref,
                          wa2m_ref, wa2s_ref, ba2_ref,
                          y_ref, s_ref,
                          pad_ref, col_ref, *, im_h, im_w, lpad):
    HW = im_h * im_w
    Cp = pad_ref.shape[0]

    # Zero the left/right halos of the row-padded scratch (lane-aligned,
    # full-width stores).  The interior is overwritten per conv call.
    pad_ref[:, 0:lpad] = jnp.zeros((Cp, lpad), jnp.float32)
    pad_ref[:, lpad + HW:lpad + HW + lpad] = jnp.zeros((Cp, lpad), jnp.float32)

    # Column-edge masks for the dx = +/-1 taps (zero-padding=1 semantics).
    col = jax.lax.broadcasted_iota(jnp.int32, (1, HW), 1) % im_w
    mask_r = (col < (im_w - 1)).astype(jnp.float32)   # output col admits dx=+1
    mask_l = (col > 0).astype(jnp.float32)            # output col admits dx=-1

    def conv3x3_lrelu(x_val, w_ref, b_ref):
        # x_val: (C, HW) f32 with C a multiple of 8.
        # Build 9 shifted copies via shifted VMEM loads from the haloed buffer
        # (no dense shift matrices), stack them in col_ref, and contract
        # against the (Cout, 9*C) weight in a single bf16 MXU matmul.
        c = x_val.shape[0]
        pad_ref[0:c, lpad:lpad + HW] = x_val
        t = 0
        for dy in (-1, 0, 1):
            for dx in (-1, 0, 1):
                off = dy * im_w + dx
                sh = pad_ref[0:c, lpad + off:lpad + off + HW]
                if dx == 1:
                    sh = sh * mask_r
                elif dx == -1:
                    sh = sh * mask_l
                col_ref[t * c:(t + 1) * c, :] = sh
                t += 1
        patches = col_ref[0:9 * c, :].astype(jnp.bfloat16)
        out = jnp.dot(w_ref[...], patches, preferred_element_type=jnp.float32)
        out = out + b_ref[...]
        return jnp.where(out >= 0, out, 0.2 * out)          # leaky_relu(0.2)

    def inorm(h):
        # Instance norm over the spatial (lane) axis; returns (x_hat, m, s).
        m = jnp.mean(h, axis=1, keepdims=True)
        v = jnp.mean((h - m) ** 2, axis=1, keepdims=True)
        s = jnp.sqrt(v + 1e-8)
        return (h - m) / s, m, s

    x = x_ref[0]                                            # (Cin_p, HW) f32

    # ---- conv1 + lrelu + instance norm #1 + style 1 ----
    h1 = conv3x3_lrelu(x, w1_ref, b1_ref)                   # (Cout_p, HW)
    a1, m1, sd1 = inorm(h1)
    s1 = (jnp.dot(wa1m_ref[...], m1, preferred_element_type=jnp.float32)
          + jnp.dot(wa1s_ref[...], sd1, preferred_element_type=jnp.float32)
          + ba1_ref[...])                                   # (Wsz, 1)

    # ---- conv2 + lrelu + avg_pool2d(2) + instance norm #2 + style 2 ----
    h2 = conv3x3_lrelu(a1, w2_ref, b2_ref)                  # (Cout_p, HW)
    pooled = jnp.dot(h2, p_ref[...], preferred_element_type=jnp.float32)
    a2, m2, sd2 = inorm(pooled)                             # (Cout_p, HW/4)
    s2 = (jnp.dot(wa2m_ref[...], m2, preferred_element_type=jnp.float32)
          + jnp.dot(wa2s_ref[...], sd2, preferred_element_type=jnp.float32)
          + ba2_ref[...])

    y_ref[0] = a2.astype(y_ref.dtype)
    s_ref[0, 0] = s1.astype(s_ref.dtype)
    s_ref[0, 1] = s2.astype(s_ref.dtype)


# ----------------------------------------------------------------------------
# Host-side glue.
# ----------------------------------------------------------------------------
def _ceil_to(v, m):
    return ((v + m - 1) // m) * m


def _pad_to(a, axis, size):
    extra = size - a.shape[axis]
    if extra == 0:
        return a
    widths = [(0, 0)] * a.ndim
    widths[axis] = (0, extra)
    return jnp.pad(a, widths)


def _make_pool_matrix(H, W):
    """(HW, HW/4) matrix: x_flat @ P == 2x2 average pooling."""
    Ho, Wo = H // 2, W // 2
    P = np.zeros((H * W, Ho * Wo), np.float32)
    for h in range(H):
        for w in range(W):
            P[h * W + w, (h // 2) * Wo + (w // 2)] = 0.25
    return P


def _conv_w_to_mat(w, cin_p, cout_p):
    """(Cout, Cin, 3, 3) -> (cout_p, 9*cin_p) bf16, col = (kh*3+kw)*cin_p + ci."""
    w = _pad_to(_pad_to(w, 1, cin_p), 0, cout_p)
    cout_pad = w.shape[0]
    w = jnp.transpose(w, (0, 2, 3, 1)).reshape(cout_pad, 9 * cin_p)
    return w.astype(jnp.bfloat16)


def style_alae_alt_encoder_block(x_nchw, params):
    """x_nchw: (N, Cin, H, W) f32 -> (x_out NCHW, style1, style2)."""
    N, Cin, H, W = x_nchw.shape
    assert H % 2 == 0 and W % 2 == 0
    HW, Ho, Wo = H * W, H // 2, W // 2
    HW4 = Ho * Wo

    w1, b1 = params["w1"], params["b1"]          # (Cout, Cin, 3, 3), (Cout,)
    w2, b2 = params["w2"], params["b2"]          # (Cout, Cout, 3, 3), (Cout,)
    wa1, ba1 = params["wa1"], params["ba1"]      # (Wsz, 2*Cout, 1, 1), (Wsz,)
    wa2, ba2 = params["wa2"], params["ba2"]
    Cout = w1.shape[0]
    Wsz = wa1.shape[0]

    Cin_p = _ceil_to(Cin, 8)
    Cout_p = _ceil_to(Cout, 8)
    Cp = max(Cin_p, Cout_p)
    LPAD = max(128, _ceil_to(W + 1, 128))        # lane-aligned halo (>= W+1)

    # Activations already NCHW-flat: (N, C, H*W) -- no transpose needed.
    x_flat = _pad_to(x_nchw.reshape(N, Cin, HW), 1, Cin_p)

    P = jnp.asarray(_make_pool_matrix(H, W))                  # (HW, HW4) f32
    w1m = _conv_w_to_mat(w1, Cin_p, Cout_p)                   # bf16
    w2m = _conv_w_to_mat(w2, Cout_p, Cout_p)                  # bf16
    b1c = _pad_to(b1, 0, Cout_p).reshape(Cout_p, 1)
    b2c = _pad_to(b2, 0, Cout_p).reshape(Cout_p, 1)
    wa1_2d = wa1[:, :, 0, 0]
    wa2_2d = wa2[:, :, 0, 0]
    wa1m = _pad_to(wa1_2d[:, :Cout], 1, Cout_p)               # (Wsz, Cout_p)
    wa1s = _pad_to(wa1_2d[:, Cout:], 1, Cout_p)
    wa2m = _pad_to(wa2_2d[:, :Cout], 1, Cout_p)
    wa2s = _pad_to(wa2_2d[:, Cout:], 1, Cout_p)
    ba1c = ba1.reshape(Wsz, 1)
    ba2c = ba2.reshape(Wsz, 1)

    kernel = functools.partial(_encoder_block_kernel,
                               im_h=H, im_w=W, lpad=LPAD)

    const2 = lambda n: (0, 0)
    per_n3 = lambda n: (n, 0, 0)
    per_n4 = lambda n: (n, 0, 0, 0)

    grid_spec = pltpu.PrefetchScalarGridSpec(
        num_scalar_prefetch=0,
        grid=(N,),
        in_specs=[
            pl.BlockSpec((1, Cin_p, HW), per_n3),
            pl.BlockSpec((HW, HW4), const2),
            pl.BlockSpec((Cout_p, 9 * Cin_p), const2),
            pl.BlockSpec((Cout_p, 1), const2),
            pl.BlockSpec((Cout_p, 9 * Cout_p), const2),
            pl.BlockSpec((Cout_p, 1), const2),
            pl.BlockSpec((Wsz, Cout_p), const2),
            pl.BlockSpec((Wsz, Cout_p), const2),
            pl.BlockSpec((Wsz, 1), const2),
            pl.BlockSpec((Wsz, Cout_p), const2),
            pl.BlockSpec((Wsz, Cout_p), const2),
            pl.BlockSpec((Wsz, 1), const2),
        ],
        out_specs=[
            pl.BlockSpec((1, Cout_p, HW4), per_n3),
            pl.BlockSpec((1, 2, Wsz, 1), per_n4),
        ],
        scratch_shapes=[
            pltpu.VMEM((Cp, HW + 2 * LPAD), jnp.float32),   # haloed row buffer
            pltpu.VMEM((9 * Cp, HW), jnp.float32),          # im2col buffer
        ],
    )
    out_shapes = (
        jax.ShapeDtypeStruct((N, Cout_p, HW4), jnp.float32),
        jax.ShapeDtypeStruct((N, 2, Wsz, 1), jnp.float32),
    )
    y, styles = pl.pallas_call(
        kernel,
        out_shape=out_shapes,
        grid_spec=grid_spec,
        compiler_params=pltpu.CompilerParams(
            dimension_semantics=("parallel",)),
    )(x_flat, P, w1m, b1c, w2m, b2c, wa1m, wa1s, ba1c, wa2m, wa2s, ba2c)

    y_nchw = y[:, :Cout, :].reshape(N, Cout, Ho, Wo)
    style1 = styles[:, 0, :, 0].reshape(N, Wsz, 1, 1)
    style2 = styles[:, 1, :, 0].reshape(N, Wsz, 1, 1)
    return y_nchw, style1, style2


# ----------------------------------------------------------------------------
# Pure-JAX reference (mirrors the PyTorch forward) for a correctness check.
# ----------------------------------------------------------------------------
def _reference(x, params):
    def conv(x, w, b, pad):
        y = jax.lax.conv_general_dilated(
            x, w, (1, 1), [(pad, pad), (pad, pad)],
            dimension_numbers=("NCHW", "OIHW", "NCHW"))
        return y + b[None, :, None, None]

    def lrelu(x):
        return jnp.where(x >= 0, x, 0.2 * x)

    def inorm(x):
        m = jnp.mean(x, axis=(2, 3), keepdims=True)
        v = jnp.mean((x - m) ** 2, axis=(2, 3), keepdims=True)
        s = jnp.sqrt(v + 1e-8)
        return (x - m) / s, m, s

    h = lrelu(conv(x, params["w1"], params["b1"], 1))
    h, m1, s1 = inorm(h)
    st1 = conv(jnp.concatenate([m1, s1], axis=1), params["wa1"], params["ba1"], 0)
    h = lrelu(conv(h, params["w2"], params["b2"], 1))
    N, C, H, W = h.shape
    h = h.reshape(N, C, H // 2, 2, W // 2, 2).mean(axis=(3, 5))
    h, m2, s2 = inorm(h)
    st2 = conv(jnp.concatenate([m2, s2], axis=1), params["wa2"], params["ba2"], 0)
    return h, st1, st2


# ----------------------------------------------------------------------------
# Deterministic parameter construction (equalized-LR scaling pre-applied).
# ----------------------------------------------------------------------------
def _init_params(key, in_size, out_size, w_size):
    ks = jax.random.split(key, 8)
    gain_conv, gain_aff = np.sqrt(2.0), 1.0

    def eqlr(k, shape, gain):
        fan_in = int(np.prod(shape[1:]))
        return jax.random.normal(k, shape, jnp.float32) * (gain / np.sqrt(fan_in))

    return {
        "w1": eqlr(ks[0], (out_size, in_size, 3, 3), gain_conv),
        "b1": 0.1 * jax.random.normal(ks[1], (out_size,), jnp.float32),
        "w2": eqlr(ks[2], (out_size, out_size, 3, 3), gain_conv),
        "b2": 0.1 * jax.random.normal(ks[3], (out_size,), jnp.float32),
        "wa1": eqlr(ks[4], (w_size, 2 * out_size, 1, 1), gain_aff),
        "ba1": 0.1 * jax.random.normal(ks[5], (w_size,), jnp.float32),
        "wa2": eqlr(ks[6], (w_size, 2 * out_size, 1, 1), gain_aff),
        "ba2": 0.1 * jax.random.normal(ks[7], (w_size,), jnp.float32),
        # self.rgb (3 -> in_size, 1x1) is unused by forward(); not materialized.
    }


if __name__ == "__main__":
    N, in_size, out_size, w_size, H, W = 2, 4, 8, 16, 16, 16

    key = jax.random.PRNGKey(0)
    kx, kp = jax.random.split(key)
    x = jax.random.normal(kx, (N, in_size, H, W), jnp.float32)
    params = _init_params(kp, in_size, out_size, w_size)

    y, style1, style2 = style_alae_alt_encoder_block(x, params)
    jax.block_until_ready((y, style1, style2))

    y_ref, st1_ref, st2_ref = _reference(x, params)
    assert y.shape == (N, out_size, H // 2, W // 2)
    assert style1.shape == (N, w_size, 1, 1) and style2.shape == (N, w_size, 1, 1)
    # Tolerance reflects bf16 MXU operands for the two conv matmuls
    # (f32 accumulation) vs. the all-f32 reference.
    np.testing.assert_allclose(np.asarray(y), np.asarray(y_ref),
                               rtol=3e-2, atol=3e-2)
    np.testing.assert_allclose(np.asarray(style1), np.asarray(st1_ref),
                               rtol=3e-2, atol=3e-2)
    np.testing.assert_allclose(np.asarray(style2), np.asarray(st2_ref),
                               rtol=3e-2, atol=3e-2)

    print("KERNEL_OK")
</pallas_src>

<mosaic_0001>
module attributes {stable_mosaic.version = 11 : i64} {
  func.func @_encoder_block_kernel(%arg0: i32, %arg1: memref<1x8x256xf32, #tpu.memory_space<vmem>>, %arg2: memref<256x64xf32, #tpu.memory_space<vmem>>, %arg3: memref<8x72xbf16, #tpu.memory_space<vmem>>, %arg4: memref<8x1xf32, #tpu.memory_space<vmem>>, %arg5: memref<8x72xbf16, #tpu.memory_space<vmem>>, %arg6: memref<8x1xf32, #tpu.memory_space<vmem>>, %arg7: memref<16x8xf32, #tpu.memory_space<vmem>>, %arg8: memref<16x8xf32, #tpu.memory_space<vmem>>, %arg9: memref<16x1xf32, #tpu.memory_space<vmem>>, %arg10: memref<16x8xf32, #tpu.memory_space<vmem>>, %arg11: memref<16x8xf32, #tpu.memory_space<vmem>>, %arg12: memref<16x1xf32, #tpu.memory_space<vmem>>, %arg13: memref<1x8x64xf32, #tpu.memory_space<vmem>>, %arg14: memref<1x2x16x1xf32, #tpu.memory_space<vmem>>, %arg15: memref<8x512xf32, #tpu.memory_space<vmem>>, %arg16: memref<72x256xf32, #tpu.memory_space<vmem>>) attributes {dimension_semantics = [#tpu.dimension_semantics<parallel>], iteration_bounds = array<i64: 2>, scalar_prefetch = 0 : i64, scratch_operands = 2 : i64, tpu.core_type = #tpu.core_type<tc>, window_params = [{transform_indices = @transform_0, window_bounds = array<i64: 1, 8, 256>}, {pipeline_mode = #tpu.pipeline_mode<synchronous>, transform_indices = @transform_1, window_bounds = array<i64: 256, 64>}, {pipeline_mode = #tpu.pipeline_mode<synchronous>, transform_indices = @transform_2, window_bounds = array<i64: 8, 72>}, {pipeline_mode = #tpu.pipeline_mode<synchronous>, transform_indices = @transform_3, window_bounds = array<i64: 8, 1>}, {pipeline_mode = #tpu.pipeline_mode<synchronous>, transform_indices = @transform_4, window_bounds = array<i64: 8, 72>}, {pipeline_mode = #tpu.pipeline_mode<synchronous>, transform_indices = @transform_5, window_bounds = array<i64: 8, 1>}, {pipeline_mode = #tpu.pipeline_mode<synchronous>, transform_indices = @transform_6, window_bounds = array<i64: 16, 8>}, {pipeline_mode = #tpu.pipeline_mode<synchronous>, transform_indices = @transform_7, window_bounds = array<i64: 16, 8>}, {pipeline_mode = #tpu.pipeline_mode<synchronous>, transform_indices = @transform_8, window_bounds = array<i64: 16, 1>}, {pipeline_mode = #tpu.pipeline_mode<synchronous>, transform_indices = @transform_9, window_bounds = array<i64: 16, 8>}, {pipeline_mode = #tpu.pipeline_mode<synchronous>, transform_indices = @transform_10, window_bounds = array<i64: 16, 8>}, {pipeline_mode = #tpu.pipeline_mode<synchronous>, transform_indices = @transform_11, window_bounds = array<i64: 16, 1>}, {transform_indices = @transform_12, window_bounds = array<i64: 1, 8, 64>}, {transform_indices = @transform_13, window_bounds = array<i64: 1, 2, 16, 1>}]} {
    %cst = arith.constant 0.000000e+00 : f32
    %0 = vector.broadcast %cst : f32 to vector<8x128xf32>
    %c0 = arith.constant 0 : index
    %c0_0 = arith.constant 0 : index
    %1 = vector.load %arg15[%c0, %c0_0] : memref<8x512xf32, #tpu.memory_space<vmem>>, vector<8x128xf32>
    tpu.vector_store %arg15[%c0, %c0_0], %0 {strides = array<i32>} : memref<8x512xf32, #tpu.memory_space<vmem>>, vector<8x128xf32>,
    %cst_1 = arith.constant 0.000000e+00 : f32
    %2 = vector.broadcast %cst_1 : f32 to vector<8x128xf32>
    %c0_2 = arith.constant 0 : index
    %c384 = arith.constant 384 : index
    %3 = vector.load %arg15[%c0_2, %c384] : memref<8x512xf32, #tpu.memory_space<vmem>>, vector<8x128xf32>
    tpu.vector_store %arg15[%c0_2, %c384], %2 {strides = array<i32>} : memref<8x512xf32, #tpu.memory_space<vmem>>, vector<8x128xf32>,
    %4 = tpu.iota {dimensions = array<i32: 1>} : vector<1x256xi32>
    %c16_i32 = arith.constant 16 : i32
    %c0_i32 = arith.constant 0 : i32
    %5 = arith.cmpi eq, %c16_i32, %c0_i32 : i32
    %c1_i32 = arith.constant 1 : i32
    %6 = arith.select %5, %c1_i32, %c16_i32 : i32
    %7 = vector.broadcast %6 : i32 to vector<1x256xi32>
    %8 = arith.remsi %4, %7 : vector<1x256xi32>
    %c0_i32_3 = arith.constant 0 : i32
    %9 = vector.broadcast %c0_i32_3 : i32 to vector<1x256xi32>
    %10 = arith.cmpi ne, %8, %9 : vector<1x256xi32>
    %c0_i32_4 = arith.constant 0 : i32
    %11 = vector.broadcast %c0_i32_4 : i32 to vector<1x256xi32>
    %12 = arith.cmpi slt, %8, %11 : vector<1x256xi32>
    %c0_i32_5 = arith.constant 0 : i32
    %13 = arith.cmpi slt, %6, %c0_i32_5 : i32
    %14 = vector.broadcast %13 : i1 to vector<1x256xi1>
    %15 = vector.broadcast %14 : vector<1x256xi1> to vector<1x256xi1>
    %16 = arith.xori %12, %15 : vector<1x256xi1>
    %17 = arith.andi %16, %10 : vector<1x256xi1>
    %18 = vector.broadcast %6 : i32 to vector<1x256xi32>
    %19 = arith.addi %8, %18 : vector<1x256xi32>
    %20 = arith.select %17, %19, %8 : vector<1x256xi1>, vector<1x256xi32>
    %c15_i32 = arith.constant 15 : i32
    %21 = vector.broadcast %c15_i32 : i32 to vector<1x256xi32>
    %22 = arith.cmpi slt, %20, %21 : vector<1x256xi32>
    %23 = arith.extui %22 : vector<1x256xi1> to vector<1x256xi32>
    %24 = arith.sitofp %23 : vector<1x256xi32> to vector<1x256xf32>
    %c0_i32_6 = arith.constant 0 : i32
    %25 = vector.broadcast %c0_i32_6 : i32 to vector<1x256xi32>
    %26 = arith.cmpi sgt, %20, %25 : vector<1x256xi32>
    %27 = arith.extui %26 : vector<1x256xi1> to vector<1x256xi32>
    %28 = arith.sitofp %27 : vector<1x256xi32> to vector<1x256xf32>
    %c0_7 = arith.constant 0 : index
    %c0_8 = arith.constant 0 : index
    %c0_9 = arith.constant 0 : index
    %29 = vector.load %arg1[%c0_7, %c0_8, %c0_9] : memref<1x8x256xf32, #tpu.memory_space<vmem>>, vector<1x8x256xf32>
    %30 = vector.shape_cast %29 : vector<1x8x256xf32> to vector<8x256xf32>
    %c0_10 = arith.constant 0 : index
    %c128 = arith.constant 128 : index
    %31 = vector.load %arg15[%c0_10, %c128] : memref<8x512xf32, #tpu.memory_space<vmem>>, vector<8x256xf32>
    tpu.vector_store %arg15[%c0_10, %c128], %30 {strides = array<i32>} : memref<8x512xf32, #tpu.memory_space<vmem>>, vector<8x256xf32>,
    %c0_11 = arith.constant 0 : index
    %c111 = arith.constant 111 : index
    %32 = vector.load %arg15[%c0_11, %c111] : memref<8x512xf32, #tpu.memory_space<vmem>>, vector<8x256xf32>
    %33 = vector.broadcast %28 : vector<1x256xf32> to vector<8x256xf32>
    %34 = arith.mulf %32, %33 : vector<8x256xf32>
    %c0_12 = arith.constant 0 : index
    %c0_13 = arith.constant 0 : index
    %35 = vector.load %arg16[%c0_12, %c0_13] : memref<72x256xf32, #tpu.memory_space<vmem>>, vector<8x256xf32>
    tpu.vector_store %arg16[%c0_12, %c0_13], %34 {strides = array<i32>} : memref<72x256xf32, #tpu.memory_space<vmem>>, vector<8x256xf32>,
    %c0_14 = arith.constant 0 : index
    %c112 = arith.constant 112 : index
    %36 = vector.load %arg15[%c0_14, %c112] : memref<8x512xf32, #tpu.memory_space<vmem>>, vector<8x256xf32>
    %c8 = arith.constant 8 : index
    %c0_15 = arith.constant 0 : index
    %37 = vector.load %arg16[%c8, %c0_15] : memref<72x256xf32, #tpu.memory_space<vmem>>, vector<8x256xf32>
    tpu.vector_store %arg16[%c8, %c0_15], %36 {strides = array<i32>} : memref<72x256xf32, #tpu.memory_space<vmem>>, vector<8x256xf32>,
    %c0_16 = arith.constant 0 : index
    %c113 = arith.constant 113 : index
    %38 = vector.load %arg15[%c0_16, %c113] : memref<8x512xf32, #tpu.memory_space<vmem>>, vector<8x256xf32>
    %39 = vector.broadcast %24 : vector<1x256xf32> to vector<8x256xf32>
    %40 = arith.mulf %38, %39 : vector<8x256xf32>
    %c16 = arith.constant 16 : index
    %c0_17 = arith.constant 0 : index
    %41 = vector.load %arg16[%c16, %c0_17] : memref<72x256xf32, #tpu.memory_space<vmem>>, vector<8x256xf32>
    tpu.vector_store %arg16[%c16, %c0_17], %40 {strides = array<i32>} : memref<72x256xf32, #tpu.memory_space<vmem>>, vector<8x256xf32>,
    %c0_18 = arith.constant 0 : index
    %c127 = arith.constant 127 : index
    %42 = vector.load %arg15[%c0_18, %c127] : memref<8x512xf32, #tpu.memory_space<vmem>>, vector<8x256xf32>
    %43 = vector.broadcast %28 : vector<1x256xf32> to vector<8x256xf32>
    %44 = arith.mulf %42, %43 : vector<8x256xf32>
    %c24 = arith.constant 24 : index
    %c0_19 = arith.constant 0 : index
    %45 = vector.load %arg16[%c24, %c0_19] : memref<72x256xf32, #tpu.memory_space<vmem>>, vector<8x256xf32>
    tpu.vector_store %arg16[%c24, %c0_19], %44 {strides = array<i32>} : memref<72x256xf32, #tpu.memory_space<vmem>>, vector<8x256xf32>,
    %c0_20 = arith.constant 0 : index
    %c128_21 = arith.constant 128 : index
    %46 = vector.load %arg15[%c0_20, %c128_21] : memref<8x512xf32, #tpu.memory_space<vmem>>, vector<8x256xf32>
    %c32 = arith.constant 32 : index
    %c0_22 = arith.constant 0 : index
    %47 = vector.load %arg16[%c32, %c0_22] : memref<72x256xf32, #tpu.memory_space<vmem>>, vector<8x256xf32>
    tpu.vector_store %arg16[%c32, %c0_22], %46 {strides = array<i32>} : memref<72x256xf32, #tpu.memory_space<vmem>>, vector<8x256xf32>,
    %c0_23 = arith.constant 0 : index
    %c129 = arith.constant 129 : index
    %48 = vector.load %arg15[%c0_23, %c129] : memref<8x512xf32, #tpu.memory_space<vmem>>, vector<8x256xf32>
    %49 = vector.broadcast %24 : vector<1x256xf32> to vector<8x256xf32>
    %50 = arith.mulf %48, %49 : vector<8x256xf32>
    %c40 = arith.constant 40 : index
    %c0_24 = arith.constant 0 : index
    %51 = vector.load %arg16[%c40, %c0_24] : memref<72x256xf32, #tpu.memory_space<vmem>>, vector<8x256xf32>
    tpu.vector_store %arg16[%c40, %c0_24], %50 {strides = array<i32>} : memref<72x256xf32, #tpu.memory_space<vmem>>, vector<8x256xf32>,
    %c0_25 = arith.constant 0 : index
    %c143 = arith.constant 143 : index
    %52 = vector.load %arg15[%c0_25, %c143] : memref<8x512xf32, #tpu.memory_space<vmem>>, vector<8x256xf32>
    %53 = vector.broadcast %28 : vector<1x256xf32> to vector<8x256xf32>
    %54 = arith.mulf %52, %53 : vector<8x256xf32>
    %c48 = arith.constant 48 : index
    %c0_26 = arith.constant 0 : index
    %55 = vector.load %arg16[%c48, %c0_26] : memref<72x256xf32, #tpu.memory_space<vmem>>, vector<8x256xf32>
    tpu.vector_store %arg16[%c48, %c0_26], %54 {strides = array<i32>} : memref<72x256xf32, #tpu.memory_space<vmem>>, vector<8x256xf32>,
    %c0_27 = arith.constant 0 : index
    %c144 = arith.constant 144 : index
    %56 = vector.load %arg15[%c0_27, %c144] : memref<8x512xf32, #tpu.memory_space<vmem>>, vector<8x256xf32>
    %c56 = arith.constant 56 : index
    %c0_28 = arith.constant 0 : index
    %57 = vector.load %arg16[%c56, %c0_28] : memref<72x256xf32, #tpu.memory_space<vmem>>, vector<8x256xf32>
    tpu.vector_store %arg16[%c56, %c0_28], %56 {strides = array<i32>} : memref<72x256xf32, #tpu.memory_space<vmem>>, vector<8x256xf32>,
    %c0_29 = arith.constant 0 : index
    %c145 = arith.constant 145 : index
    %58 = vector.load %arg15[%c0_29, %c145] : memref<8x512xf32, #tpu.memory_space<vmem>>, vector<8x256xf32>
    %59 = vector.broadcast %24 : vector<1x256xf32> to vector<8x256xf32>
    %60 = arith.mulf %58, %59 : vector<8x256xf32>
    %c64 = arith.constant 64 : index
    %c0_30 = arith.constant 0 : index
    %61 = vector.load %arg16[%c64, %c0_30] : memref<72x256xf32, #tpu.memory_space<vmem>>, vector<8x256xf32>
    tpu.vector_store %arg16[%c64, %c0_30], %60 {strides = array<i32>} : memref<72x256xf32, #tpu.memory_space<vmem>>, vector<8x256xf32>,
    %c0_31 = arith.constant 0 : index
    %c0_32 = arith.constant 0 : index
    %62 = vector.load %arg16[%c0_31, %c0_32] : memref<72x256xf32, #tpu.memory_space<vmem>>, vector<72x256xf32>
    %63 = arith.truncf %62 : vector<72x256xf32> to vector<72x256xbf16>
    %c0_33 = arith.constant 0 : index
    %c0_34 = arith.constant 0 : index
    %64 = vector.load %arg3[%c0_33, %c0_34] : memref<8x72xbf16, #tpu.memory_space<vmem>>, vector<8x72xbf16>
    %cst_35 = arith.constant dense<0.000000e+00> : vector<8x256xf32>
    %65 = tpu.matmul %64, %63, %cst_35 {dimension_numbers = #tpu.dot_dimension_numbers<[1], [0], [0], [1], [0, 0, 1, 1], [], []>} : vector<8x72xbf16>, vector<72x256xbf16>, vector<8x256xf32> -> vector<8x256xf32>
    %c0_36 = arith.constant 0 : index
    %c0_37 = arith.constant 0 : index
    %66 = vector.load %arg4[%c0_36, %c0_37] : memref<8x1xf32, #tpu.memory_space<vmem>>, vector<8x1xf32>
    %67 = vector.broadcast %66 : vector<8x1xf32> to vector<8x256xf32>
    %68 = arith.addf %65, %67 : vector<8x256xf32>
    %cst_38 = arith.constant 0.000000e+00 : f32
    %69 = vector.broadcast %cst_38 : f32 to vector<8x256xf32>
    %70 = arith.cmpf oge, %68, %69 : vector<8x256xf32>
    %cst_39 = arith.constant 2.000000e-01 : f32
    %71 = vector.broadcast %cst_39 : f32 to vector<8x256xf32>
    %72 = arith.mulf %71, %68 : vector<8x256xf32>
    %73 = arith.select %70, %68, %72 : vector<8x256xi1>, vector<8x256xf32>
    %cst_40 = arith.constant dense<0.000000e+00> : vector<8xf32>
    %74 = vector.multi_reduction <add>, %73, %cst_40 [1] : vector<8x256xf32> to vector<8xf32>
    %75 = vector.shape_cast %74 : vector<8xf32> to vector<8x1xf32>
    %cst_41 = arith.constant 2.560000e+02 : f32
    %76 = vector.broadcast %cst_41 : f32 to vector<8x1xf32>
    %77 = arith.divf %75, %76 : vector<8x1xf32>
    %78 = vector.broadcast %77 : vector<8x1xf32> to vector<8x256xf32>
    %79 = arith.subf %73, %78 : vector<8x256xf32>
    %80 = arith.mulf %79, %79 : vector<8x256xf32>
    %cst_42 = arith.constant dense<0.000000e+00> : vector<8xf32>
    %81 = vector.multi_reduction <add>, %80, %cst_42 [1] : vector<8x256xf32> to vector<8xf32>
    %82 = vector.shape_cast %81 : vector<8xf32> to vector<8x1xf32>
    %cst_43 = arith.constant 2.560000e+02 : f32
    %83 = vector.broadcast %cst_43 : f32 to vector<8x1xf32>
    %84 = arith.divf %82, %83 : vector<8x1xf32>
    %cst_44 = arith.constant 9.99999993E-9 : f32
    %85 = vector.broadcast %cst_44 : f32 to vector<8x1xf32>
    %86 = arith.addf %84, %85 : vector<8x1xf32>
    %87 = math.sqrt %86 : vector<8x1xf32>
    %88 = vector.broadcast %77 : vector<8x1xf32> to vector<8x256xf32>
    %89 = arith.subf %73, %88 : vector<8x256xf32>
    %90 = vector.broadcast %87 : vector<8x1xf32> to vector<8x256xf32>
    %91 = arith.divf %89, %90 : vector<8x256xf32>
    %c0_45 = arith.constant 0 : index
    %c0_46 = arith.constant 0 : index
    %92 = vector.load %arg7[%c0_45, %c0_46] : memref<16x8xf32, #tpu.memory_space<vmem>>, vector<16x8xf32>
    %cst_47 = arith.constant dense<0.000000e+00> : vector<16x1xf32>
    %93 = tpu.matmul %92, %77, %cst_47 {dimension_numbers = #tpu.dot_dimension_numbers<[1], [0], [0], [1], [0, 0, 1, 1], [], []>} : vector<16x8xf32>, vector<8x1xf32>, vector<16x1xf32> -> vector<16x1xf32>
    %c0_48 = arith.constant 0 : index
    %c0_49 = arith.constant 0 : index
    %94 = vector.load %arg8[%c0_48, %c0_49] : memref<16x8xf32, #tpu.memory_space<vmem>>, vector<16x8xf32>
    %cst_50 = arith.constant dense<0.000000e+00> : vector<16x1xf32>
    %95 = tpu.matmul %94, %87, %cst_50 {dimension_numbers = #tpu.dot_dimension_numbers<[1], [0], [0], [1], [0, 0, 1, 1], [], []>} : vector<16x8xf32>, vector<8x1xf32>, vector<16x1xf32> -> vector<16x1xf32>
    %96 = arith.addf %93, %95 : vector<16x1xf32>
    %c0_51 = arith.constant 0 : index
    %c0_52 = arith.constant 0 : index
    %97 = vector.load %arg9[%c0_51, %c0_52] : memref<16x1xf32, #tpu.memory_space<vmem>>, vector<16x1xf32>
    %98 = arith.addf %96, %97 : vector<16x1xf32>
    %c0_53 = arith.constant 0 : index
    %c128_54 = arith.constant 128 : index
    %99 = vector.load %arg15[%c0_53, %c128_54] : memref<8x512xf32, #tpu.memory_space<vmem>>, vector<8x256xf32>
    tpu.vector_store %arg15[%c0_53, %c128_54], %91 {strides = array<i32>} : memref<8x512xf32, #tpu.memory_space<vmem>>, vector<8x256xf32>,
    %c0_55 = arith.constant 0 : index
    %c111_56 = arith.constant 111 : index
    %100 = vector.load %arg15[%c0_55, %c111_56] : memref<8x512xf32, #tpu.memory_space<vmem>>, vector<8x256xf32>
    %101 = vector.broadcast %28 : vector<1x256xf32> to vector<8x256xf32>
    %102 = arith.mulf %100, %101 : vector<8x256xf32>
    %c0_57 = arith.constant 0 : index
    %c0_58 = arith.constant 0 : index
    %103 = vector.load %arg16[%c0_57, %c0_58] : memref<72x256xf32, #tpu.memory_space<vmem>>, vector<8x256xf32>
    tpu.vector_store %arg16[%c0_57, %c0_58], %102 {strides = array<i32>} : memref<72x256xf32, #tpu.memory_space<vmem>>, vector<8x256xf32>,
    %c0_59 = arith.constant 0 : index
    %c112_60 = arith.constant 112 : index
    %104 = vector.load %arg15[%c0_59, %c112_60] : memref<8x512xf32, #tpu.memory_space<vmem>>, vector<8x256xf32>
    %c8_61 = arith.constant 8 : index
    %c0_62 = arith.constant 0 : index
    %105 = vector.load %arg16[%c8_61, %c0_62] : memref<72x256xf32, #tpu.memory_space<vmem>>, vector<8x256xf32>
    tpu.vector_store %arg16[%c8_61, %c0_62], %104 {strides = array<i32>} : memref<72x256xf32, #tpu.memory_space<vmem>>, vector<8x256xf32>,
    %c0_63 = arith.constant 0 : index
    %c113_64 = arith.constant 113 : index
    %106 = vector.load %arg15[%c0_63, %c113_64] : memref<8x512xf32, #tpu.memory_space<vmem>>, vector<8x256xf32>
    %107 = vector.broadcast %24 : vector<1x256xf32> to vector<8x256xf32>
    %108 = arith.mulf %106, %107 : vector<8x256xf32>
    %c16_65 = arith.constant 16 : index
    %c0_66 = arith.constant 0 : index
    %109 = vector.load %arg16[%c16_65, %c0_66] : memref<72x256xf32, #tpu.memory_space<vmem>>, vector<8x256xf32>
    tpu.vector_store %arg16[%c16_65, %c0_66], %108 {strides = array<i32>} : memref<72x256xf32, #tpu.memory_space<vmem>>, vector<8x256xf32>,
    %c0_67 = arith.constant 0 : index
    %c127_68 = arith.constant 127 : index
    %110 = vector.load %arg15[%c0_67, %c127_68] : memref<8x512xf32, #tpu.memory_space<vmem>>, vector<8x256xf32>
    %111 = vector.broadcast %28 : vector<1x256xf32> to vector<8x256xf32>
    %112 = arith.mulf %110, %111 : vector<8x256xf32>
    %c24_69 = arith.constant 24 : index
    %c0_70 = arith.constant 0 : index
    %113 = vector.load %arg16[%c24_69, %c0_70] : memref<72x256xf32, #tpu.memory_space<vmem>>, vector<8x256xf32>
    tpu.vector_store %arg16[%c24_69, %c0_70], %112 {strides = array<i32>} : memref<72x256xf32, #tpu.memory_space<vmem>>, vector<8x256xf32>,
    %c0_71 = arith.constant 0 : index
    %c128_72 = arith.constant 128 : index
    %114 = vector.load %arg15[%c0_71, %c128_72] : memref<8x512xf32, #tpu.memory_space<vmem>>, vector<8x256xf32>
    %c32_73 = arith.constant 32 : index
    %c0_74 = arith.constant 0 : index
    %115 = vector.load %arg16[%c32_73, %c0_74] : memref<72x256xf32, #tpu.memory_space<vmem>>, vector<8x256xf32>
    tpu.vector_store %arg16[%c32_73, %c0_74], %114 {strides = array<i32>} : memref<72x256xf32, #tpu.memory_space<vmem>>, vector<8x256xf32>,
    %c0_75 = arith.constant 0 : index
    %c129_76 = arith.constant 129 : index
    %116 = vector.load %arg15[%c0_75, %c129_76] : memref<8x512xf32, #tpu.memory_space<vmem>>, vector<8x256xf32>
    %117 = vector.broadcast %24 : vector<1x256xf32> to vector<8x256xf32>
    %118 = arith.mulf %116, %117 : vector<8x256xf32>
    %c40_77 = arith.constant 40 : index
    %c0_78 = arith.constant 0 : index
    %119 = vector.load %arg16[%c40_77, %c0_78] : memref<72x256xf32, #tpu.memory_space<vmem>>, vector<8x256xf32>
    tpu.vector_store %arg16[%c40_77, %c0_78], %118 {strides = array<i32>} : memref<72x256xf32, #tpu.memory_space<vmem>>, vector<8x256xf32>,
    %c0_79 = arith.constant 0 : index
    %c143_80 = arith.constant 143 : index
    %120 = vector.load %arg15[%c0_79, %c143_80] : memref<8x512xf32, #tpu.memory_space<vmem>>, vector<8x256xf32>
    %121 = vector.broadcast %28 : vector<1x256xf32> to vector<8x256xf32>
    %122 = arith.mulf %120, %121 : vector<8x256xf32>
    %c48_81 = arith.constant 48 : index
    %c0_82 = arith.constant 0 : index
    %123 = vector.load %arg16[%c48_81, %c0_82] : memref<72x256xf32, #tpu.memory_space<vmem>>, vector<8x256xf32>
    tpu.vector_store %arg16[%c48_81, %c0_82], %122 {strides = array<i32>} : memref<72x256xf32, #tpu.memory_space<vmem>>, vector<8x256xf32>,
    %c0_83 = arith.constant 0 : index
    %c144_84 = arith.constant 144 : index
    %124 = vector.load %arg15[%c0_83, %c144_84] : memref<8x512xf32, #tpu.memory_space<vmem>>, vector<8x256xf32>
    %c56_85 = arith.constant 56 : index
    %c0_86 = arith.constant 0 : index
    %125 = vector.load %arg16[%c56_85, %c0_86] : memref<72x256xf32, #tpu.memory_space<vmem>>, vector<8x256xf32>
    tpu.vector_store %arg16[%c56_85, %c0_86], %124 {strides = array<i32>} : memref<72x256xf32, #tpu.memory_space<vmem>>, vector<8x256xf32>,
    %c0_87 = arith.constant 0 : index
    %c145_88 = arith.constant 145 : index
    %126 = vector.load %arg15[%c0_87, %c145_88] : memref<8x512xf32, #tpu.memory_space<vmem>>, vector<8x256xf32>
    %127 = vector.broadcast %24 : vector<1x256xf32> to vector<8x256xf32>
    %128 = arith.mulf %126, %127 : vector<8x256xf32>
    %c64_89 = arith.constant 64 : index
    %c0_90 = arith.constant 0 : index
    %129 = vector.load %arg16[%c64_89, %c0_90] : memref<72x256xf32, #tpu.memory_space<vmem>>, vector<8x256xf32>
    tpu.vector_store %arg16[%c64_89, %c0_90], %128 {strides = array<i32>} : memref<72x256xf32, #tpu.memory_space<vmem>>, vector<8x256xf32>,
    %c0_91 = arith.constant 0 : index
    %c0_92 = arith.constant 0 : index
    %130 = vector.load %arg16[%c0_91, %c0_92] : memref<72x256xf32, #tpu.memory_space<vmem>>, vector<72x256xf32>
    %131 = arith.truncf %130 : vector<72x256xf32> to vector<72x256xbf16>
    %c0_93 = arith.constant 0 : index
    %c0_94 = arith.constant 0 : index
    %132 = vector.load %arg5[%c0_93, %c0_94] : memref<8x72xbf16, #tpu.memory_space<vmem>>, vector<8x72xbf16>
    %cst_95 = arith.constant dense<0.000000e+00> : vector<8x256xf32>
    %133 = tpu.matmul %132, %131, %cst_95 {dimension_numbers = #tpu.dot_dimension_numbers<[1], [0], [0], [1], [0, 0, 1, 1], [], []>} : vector<8x72xbf16>, vector<72x256xbf16>, vector<8x256xf32> -> vector<8x256xf32>
    %c0_96 = arith.constant 0 : index
    %c0_97 = arith.constant 0 : index
    %134 = vector.load %arg6[%c0_96, %c0_97] : memref<8x1xf32, #tpu.memory_space<vmem>>, vector<8x1xf32>
    %135 = vector.broadcast %134 : vector<8x1xf32> to vector<8x256xf32>
    %136 = arith.addf %133, %135 : vector<8x256xf32>
    %cst_98 = arith.constant 0.000000e+00 : f32
    %137 = vector.broadcast %cst_98 : f32 to vector<8x256xf32>
    %138 = arith.cmpf oge, %136, %137 : vector<8x256xf32>
    %cst_99 = arith.constant 2.000000e-01 : f32
    %139 = vector.broadcast %cst_99 : f32 to vector<8x256xf32>
    %140 = arith.mulf %139, %136 : vector<8x256xf32>
    %141 = arith.select %138, %136, %140 : vector<8x256xi1>, vector<8x256xf32>
    %c0_100 = arith.constant 0 : index
    %c0_101 = arith.constant 0 : index
    %142 = vector.load %arg2[%c0_100, %c0_101] : memref<256x64xf32, #tpu.memory_space<vmem>>, vector<256x64xf32>
    %cst_102 = arith.constant dense<0.000000e+00> : vector<8x64xf32>
    %143 = tpu.matmul %141, %142, %cst_102 {dimension_numbers = #tpu.dot_dimension_numbers<[1], [0], [0], [1], [0, 0, 1, 1], [], []>} : vector<8x256xf32>, vector<256x64xf32>, vector<8x64xf32> -> vector<8x64xf32>
    %cst_103 = arith.constant dense<0.000000e+00> : vector<8xf32>
    %144 = vector.multi_reduction <add>, %143, %cst_103 [1] : vector<8x64xf32> to vector<8xf32>
    %145 = vector.shape_cast %144 : vector<8xf32> to vector<8x1xf32>
    %cst_104 = arith.constant 6.400000e+01 : f32
    %146 = vector.broadcast %cst_104 : f32 to vector<8x1xf32>
    %147 = arith.divf %145, %146 : vector<8x1xf32>
    %148 = vector.broadcast %147 : vector<8x1xf32> to vector<8x64xf32>
    %149 = arith.subf %143, %148 : vector<8x64xf32>
    %150 = arith.mulf %149, %149 : vector<8x64xf32>
    %cst_105 = arith.constant dense<0.000000e+00> : vector<8xf32>
    %151 = vector.multi_reduction <add>, %150, %cst_105 [1] : vector<8x64xf32> to vector<8xf32>
    %152 = vector.shape_cast %151 : vector<8xf32> to vector<8x1xf32>
    %cst_106 = arith.constant 6.400000e+01 : f32
    %153 = vector.broadcast %cst_106 : f32 to vector<8x1xf32>
    %154 = arith.divf %152, %153 : vector<8x1xf32>
    %cst_107 = arith.constant 9.99999993E-9 : f32
    %155 = vector.broadcast %cst_107 : f32 to vector<8x1xf32>
    %156 = arith.addf %154, %155 : vector<8x1xf32>
    %157 = math.sqrt %156 : vector<8x1xf32>
    %158 = vector.broadcast %147 : vector<8x1xf32> to vector<8x64xf32>
    %159 = arith.subf %143, %158 : vector<8x64xf32>
    %160 = vector.broadcast %157 : vector<8x1xf32> to vector<8x64xf32>
    %161 = arith.divf %159, %160 : vector<8x64xf32>
    %c0_108 = arith.constant 0 : index
    %c0_109 = arith.constant 0 : index
    %162 = vector.load %arg10[%c0_108, %c0_109] : memref<16x8xf32, #tpu.memory_space<vmem>>, vector<16x8xf32>
    %cst_110 = arith.constant dense<0.000000e+00> : vector<16x1xf32>
    %163 = tpu.matmul %162, %147, %cst_110 {dimension_numbers = #tpu.dot_dimension_numbers<[1], [0], [0], [1], [0, 0, 1, 1], [], []>} : vector<16x8xf32>, vector<8x1xf32>, vector<16x1xf32> -> vector<16x1xf32>
    %c0_111 = arith.constant 0 : index
    %c0_112 = arith.constant 0 : index
    %164 = vector.load %arg11[%c0_111, %c0_112] : memref<16x8xf32, #tpu.memory_space<vmem>>, vector<16x8xf32>
    %cst_113 = arith.constant dense<0.000000e+00> : vector<16x1xf32>
    %165 = tpu.matmul %164, %157, %cst_113 {dimension_numbers = #tpu.dot_dimension_numbers<[1], [0], [0], [1], [0, 0, 1, 1], [], []>} : vector<16x8xf32>, vector<8x1xf32>, vector<16x1xf32> -> vector<16x1xf32>
    %166 = arith.addf %163, %165 : vector<16x1xf32>
    %c0_114 = arith.constant 0 : index
    %c0_115 = arith.constant 0 : index
    %167 = vector.load %arg12[%c0_114, %c0_115] : memref<16x1xf32, #tpu.memory_space<vmem>>, vector<16x1xf32>
    %168 = arith.addf %166, %167 : vector<16x1xf32>
    %c0_116 = arith.constant 0 : index
    %c0_117 = arith.constant 0 : index
    %c0_118 = arith.constant 0 : index
    %169 = vector.load %arg13[%c0_116, %c0_117, %c0_118] : memref<1x8x64xf32, #tpu.memory_space<vmem>>, vector<1x8x64xf32>
    %170 = vector.shape_cast %169 : vector<1x8x64xf32> to vector<8x64xf32>
    %171 = vector.shape_cast %161 : vector<8x64xf32> to vector<1x8x64xf32>
    tpu.vector_store %arg13[%c0_116, %c0_117, %c0_118], %171 {strides = array<i32>} : memref<1x8x64xf32, #tpu.memory_space<vmem>>, vector<1x8x64xf32>,
    %c0_119 = arith.constant 0 : index
    %c0_120 = arith.constant 0 : index
    %c0_121 = arith.constant 0 : index
    %c0_122 = arith.constant 0 : index
    %172 = vector.load %arg14[%c0_119, %c0_120, %c0_121, %c0_122] : memref<1x2x16x1xf32, #tpu.memory_space<vmem>>, vector<1x1x16x1xf32>
    %173 = vector.shape_cast %172 : vector<1x1x16x1xf32> to vector<16x1xf32>
    %174 = vector.shape_cast %98 : vector<16x1xf32> to vector<1x1x16x1xf32>
    tpu.vector_store %arg14[%c0_119, %c0_120, %c0_121, %c0_122], %174 {strides = array<i32>} : memref<1x2x16x1xf32, #tpu.memory_space<vmem>>, vector<1x1x16x1xf32>,
    %c0_123 = arith.constant 0 : index
    %c1 = arith.constant 1 : index
    %c0_124 = arith.constant 0 : index
    %c0_125 = arith.constant 0 : index
    %175 = vector.load %arg14[%c0_123, %c1, %c0_124, %c0_125] : memref<1x2x16x1xf32, #tpu.memory_space<vmem>>, vector<1x1x16x1xf32>
    %176 = vector.shape_cast %175 : vector<1x1x16x1xf32> to vector<16x1xf32>
    %177 = vector.shape_cast %168 : vector<16x1xf32> to vector<1x1x16x1xf32>
    tpu.vector_store %arg14[%c0_123, %c1, %c0_124, %c0_125], %177 {strides = array<i32>} : memref<1x2x16x1xf32, #tpu.memory_space<vmem>>, vector<1x1x16x1xf32>,
    return
  }
  func.func @transform_0(%arg0: i32) -> (i32, i32, i32) {
    %c0_i32 = arith.constant 0 : i32
    %c0_i32_0 = arith.constant 0 : i32
    %c0_i32_1 = arith.constant 0 : i32
    return %arg0, %c0_i32, %c0_i32_0 : i32, i32, i32
  }
  func.func @transform_1(%arg0: i32) -> (i32, i32) {
    %c0_i32 = arith.constant 0 : i32
    %c0_i32_0 = arith.constant 0 : i32
    %c0_i32_1 = arith.constant 0 : i32
    return %c0_i32, %c0_i32_0 : i32, i32
  }
  func.func @transform_2(%arg0: i32) -> (i32, i32) {
    %c0_i32 = arith.constant 0 : i32
    %c0_i32_0 = arith.constant 0 : i32
    %c0_i32_1 = arith.constant 0 : i32
    return %c0_i32, %c0_i32_0 : i32, i32
  }
  func.func @transform_3(%arg0: i32) -> (i32, i32) {
    %c0_i32 = arith.constant 0 : i32
    %c0_i32_0 = arith.constant 0 : i32
    %c0_i32_1 = arith.constant 0 : i32
    return %c0_i32, %c0_i32_0 : i32, i32
  }
  func.func @transform_4(%arg0: i32) -> (i32, i32) {
    %c0_i32 = arith.constant 0 : i32
    %c0_i32_0 = arith.constant 0 : i32
    %c0_i32_1 = arith.constant 0 : i32
    return %c0_i32, %c0_i32_0 : i32, i32
  }
  func.func @transform_5(%arg0: i32) -> (i32, i32) {
    %c0_i32 = arith.constant 0 : i32
    %c0_i32_0 = arith.constant 0 : i32
    %c0_i32_1 = arith.constant 0 : i32
    return %c0_i32, %c0_i32_0 : i32, i32
  }
  func.func @transform_6(%arg0: i32) -> (i32, i32) {
    %c0_i32 = arith.constant 0 : i32
    %c0_i32_0 = arith.constant 0 : i32
    %c0_i32_1 = arith.constant 0 : i32
    return %c0_i32, %c0_i32_0 : i32, i32
  }
  func.func @transform_7(%arg0: i32) -> (i32, i32) {
    %c0_i32 = arith.constant 0 : i32
    %c0_i32_0 = arith.constant 0 : i32
    %c0_i32_1 = arith.constant 0 : i32
    return %c0_i32, %c0_i32_0 : i32, i32
  }
  func.func @transform_8(%arg0: i32) -> (i32, i32) {
    %c0_i32 = arith.constant 0 : i32
    %c0_i32_0 = arith.constant 0 : i32
    %c0_i32_1 = arith.constant 0 : i32
    return %c0_i32, %c0_i32_0 : i32, i32
  }
  func.func @transform_9(%arg0: i32) -> (i32, i32) {
    %c0_i32 = arith.constant 0 : i32
    %c0_i32_0 = arith.constant 0 : i32
    %c0_i32_1 = arith.constant 0 : i32
    return %c0_i32, %c0_i32_0 : i32, i32
  }
  func.func @transform_10(%arg0: i32) -> (i32, i32) {
    %c0_i32 = arith.constant 0 : i32
    %c0_i32_0 = arith.constant 0 : i32
    %c0_i32_1 = arith.constant 0 : i32
    return %c0_i32, %c0_i32_0 : i32, i32
  }
  func.func @transform_11(%arg0: i32) -> (i32, i32) {
    %c0_i32 = arith.constant 0 : i32
    %c0_i32_0 = arith.constant 0 : i32
    %c0_i32_1 = arith.constant 0 : i32
    return %c0_i32, %c0_i32_0 : i32, i32
  }
  func.func @transform_12(%arg0: i32) -> (i32, i32, i32) {
    %c0_i32 = arith.constant 0 : i32
    %c0_i32_0 = arith.constant 0 : i32
    %c0_i32_1 = arith.constant 0 : i32
    return %arg0, %c0_i32, %c0_i32_0 : i32, i32, i32
  }
  func.func @transform_13(%arg0: i32) -> (i32, i32, i32, i32) {
    %c0_i32 = arith.constant 0 : i32
    %c0_i32_0 = arith.constant 0 : i32
    %c0_i32_1 = arith.constant 0 : i32
    %c0_i32_2 = arith.constant 0 : i32
    return %arg0, %c0_i32, %c0_i32_0, %c0_i32_1 : i32, i32, i32, i32
  }
}

</mosaic_0001>

<llo_original>
// kernel: tpu_custom_call.1
$region0: #{tpu_custom_call.1}
  #allocation0 [shape = 'u32[]', space=smem, size = 0x4, offset = 0x4, fixed_abs, tag = 'smem constant byte address 0x4 - core index']
  #allocation1 [shape = 'u32[72,128]{1,0:T(1,128)}', space=vmem, size = 0x9000, scoped, tag = 'internal scratch']
  #allocation2 [shape = 'f32[8,512]{1,0:T(8,128)}', space=vmem, size = 0x4000, scoped, tag = 'scratch operand']
  #allocation3 [shape = 'f32[72,256]{1,0:T(8,128)}', space=vmem, size = 0x12000, scoped, tag = 'scratch operand']
  %s0 = inlined_call_operand.vmem [shape: f32[2,8,256], index: 0, kind: input, shape index: {}]
  %s1 = inlined_call_operand.vmem [shape: f32[256,64], index: 1, kind: input, shape index: {}]
  %s2 = inlined_call_operand.vmem [shape: bf16[8,72], index: 2, kind: input, shape index: {}]
  %s3 = inlined_call_operand.vmem [shape: f32[8,1], index: 3, kind: input, shape index: {}]
  %s4 = inlined_call_operand.vmem [shape: bf16[8,72], index: 4, kind: input, shape index: {}]
  %s5 = inlined_call_operand.vmem [shape: f32[8,1], index: 5, kind: input, shape index: {}]
  %s6 = inlined_call_operand.vmem [shape: f32[16,8], index: 6, kind: input, shape index: {}]
  %s7 = inlined_call_operand.vmem [shape: f32[16,8], index: 7, kind: input, shape index: {}]
  %s8 = inlined_call_operand.vmem [shape: f32[16,1], index: 8, kind: input, shape index: {}]
  %s9 = inlined_call_operand.vmem [shape: f32[16,8], index: 9, kind: input, shape index: {}]
  %s10 = inlined_call_operand.vmem [shape: f32[16,8], index: 10, kind: input, shape index: {}]
  %s11 = inlined_call_operand.vmem [shape: f32[16,1], index: 11, kind: input, shape index: {}]
  %s12 = inlined_call_operand.hbm [shape: f32[2,8,64], index: 12, kind: output, shape index: {0}]
  %s13 = inlined_call_operand.vmem [shape: f32[2,2,16,1], index: 13, kind: output, shape index: {1}]
  %14 = xla_tuple %s12, %s13
  %s15 = sld [smem:[#allocation0]]
  $region89: #{tpu_custom_call.1} parent=0
    _
  %s17 = ssub.s32 1, %s15
  %s18 = scalar_select 0, %s17, %s15
  $region1: #{tpu_custom_call.1} parent=0
    #allocation4 [shape = 'u8[8192]{0}', space=vmem, size = 0x2000, scoped, tag = 'output window, operand 0']
    #allocation5 [shape = 's32[2]{0}', space=sflag, size = 0x8, scoped, tag = 'scoped memory for tpu_custom_call.1']
    %19 = vsyncpa [#allocation5], 0
    %s20 = scalar_lea.sflag [#allocation5], 1
    %21 = vsyncpa %s20, 0
    loop: start=0, step=1, limit=4
    $region2: #{tpu_custom_call.1} parent=1 // loop_pre_header
      _
    $region3: #{tpu_custom_call.1} parent=1 // loop_header
      %s23 = sphi 0, %s27
      %p24 = scmp.ge.s32.totalorder %s23, 4
      %s33 = sphi 0, %s35
      %s36 = sphi 0, %s33
      %s37 = sphi 0, %s36
      %s53 = sphi 0, %s37
      %s57 = sphi 0, %s57
      %s59 = sphi 0, %s57
      %s60 = sphi 0, %s59
      %s74 = sphi 0, %s60
      %s78 = sphi 0, %s78
      %s80 = sphi 0, %s78
      %s81 = sphi 0, %s80
      %s95 = sphi 0, %s81
      %s99 = sphi 0, %s99
      %s101 = sphi 0, %s99
      %s102 = sphi 0, %s101
      %s116 = sphi 0, %s102
      %s120 = sphi 0, %s120
      %s122 = sphi 0, %s120
      %s123 = sphi 0, %s122
      %s137 = sphi 0, %s123
      %s141 = sphi 0, %s141
      %s143 = sphi 0, %s141
      %s144 = sphi 0, %s143
      %s158 = sphi 0, %s144
      %s162 = sphi 0, %s162
      %s164 = sphi 0, %s162
      %s165 = sphi 0, %s164
      %s179 = sphi 0, %s165
      %s183 = sphi 0, %s183
      %s185 = sphi 0, %s183
      %s186 = sphi 0, %s185
      %s200 = sphi 0, %s186
      %s204 = sphi 0, %s204
      %s206 = sphi 0, %s204
      %s207 = sphi 0, %s206
      %s221 = sphi 0, %s207
      %s225 = sphi 0, %s225
      %s227 = sphi 0, %s225
      %s228 = sphi 0, %s227
      %s242 = sphi 0, %s228
      %s246 = sphi 0, %s246
      %s248 = sphi 0, %s246
      %s249 = sphi 0, %s248
      %s263 = sphi 0, %s249
      %s267 = sphi 0, %s267
      %s269 = sphi 0, %s267
      %s270 = sphi 0, %s269
      %s284 = sphi 0, %s270
      %s290 = sphi 0, %s292
      %s293 = sphi 0, %s290
      %s294 = sphi 0, %s293
      %s310 = sphi 0, %s294
      %s316 = sphi 0, %s318
      %s319 = sphi 0, %s316
      %s320 = sphi 0, %s319
      %s336 = sphi 0, %s320
    $region4: #{tpu_custom_call.1} parent=1 // loop_header_branch
      %26 = sbr.rel (%p24) target = $region8
    $region5: #{tpu_custom_call.1} parent=1 // loop_body
      %s28 = ssub.s32 %s23, 1
      %s29 = ssub.s32 %s23, 2
      %s30 = sadd.s32 %s23, 1
      %s31 = ssub.s32 %s23, %s30
      %p32 = scmp.eq.s32.totalorder %s31, 0
      %s34 = sadd.s32 %s33, 1
      %s35 = scalar_select %p32, %s33, %s34
      %p38 = pneg %p32
      %p39 = scmp.eq.s32.totalorder %s23, 1
      %p40 = por %p38, %p39
      %p41 = scmp.ne.s32.totalorder %s33, %s36
      %p42 = scmp.eq.s32.totalorder %s23, 0
      %p43 = por %p41, %p42
      %p44 = scmp.ne.s32.totalorder %s33, %s36
      %p45 = scmp.eq.s32.totalorder %s28, 1
      %p46 = por %p44, %p45
      %p47 = scmp.ne.s32.totalorder %s36, %s37
      %p48 = scmp.eq.s32.totalorder %s28, 0
      %p49 = por %p47, %p48
      %p50 = scmp.ne.s32.totalorder %s36, %s37
      %p51 = scmp.eq.s32.totalorder %s29, 1
      %p52 = por %p50, %p51
      %p54 = scmp.ne.s32.totalorder %s37, %s53
      %p55 = scmp.eq.s32.totalorder %s29, 0
      %p56 = por %p54, %p55
      %s58 = sadd.s32 %s57, 1
      %p61 = scmp.eq.s32.totalorder %s23, 1
      %p62 = scmp.ne.s32.totalorder %s57, %s59
      %p63 = scmp.eq.s32.totalorder %s23, 0
      %p64 = por %p62, %p63
      %p65 = scmp.ne.s32.totalorder %s57, %s59
      %p66 = scmp.eq.s32.totalorder %s28, 1
      %p67 = por %p65, %p66
      %p68 = scmp.ne.s32.totalorder %s59, %s60
      %p69 = scmp.eq.s32.totalorder %s28, 0
      %p70 = por %p68, %p69
      %p71 = scmp.ne.s32.totalorder %s59, %s60
      %p72 = scmp.eq.s32.totalorder %s29, 1
      %p73 = por %p71, %p72
      %p75 = scmp.ne.s32.totalorder %s60, %s74
      %p76 = scmp.eq.s32.totalorder %s29, 0
      %p77 = por %p75, %p76
      %s79 = sadd.s32 %s78, 1
      %p82 = scmp.eq.s32.totalorder %s23, 1
      %p83 = scmp.ne.s32.totalorder %s78, %s80
      %p84 = scmp.eq.s32.totalorder %s23, 0
      %p85 = por %p83, %p84
      %p86 = scmp.ne.s32.totalorder %s78, %s80
      %p87 = scmp.eq.s32.totalorder %s28, 1
      %p88 = por %p86, %p87
      %p89 = scmp.ne.s32.totalorder %s80, %s81
      %p90 = scmp.eq.s32.totalorder %s28, 0
      %p91 = por %p89, %p90
      %p92 = scmp.ne.s32.totalorder %s80, %s81
      %p93 = scmp.eq.s32.totalorder %s29, 1
      %p94 = por %p92, %p93
      %p96 = scmp.ne.s32.totalorder %s81, %s95
      %p97 = scmp.eq.s32.totalorder %s29, 0
      %p98 = por %p96, %p97
      %s100 = sadd.s32 %s99, 1
      %p103 = scmp.eq.s32.totalorder %s23, 1
      %p104 = scmp.ne.s32.totalorder %s99, %s101
      %p105 = scmp.eq.s32.totalorder %s23, 0
      %p106 = por %p104, %p105
      %p107 = scmp.ne.s32.totalorder %s99, %s101
      %p108 = scmp.eq.s32.totalorder %s28, 1
      %p109 = por %p107, %p108
      %p110 = scmp.ne.s32.totalorder %s101, %s102
      %p111 = scmp.eq.s32.totalorder %s28, 0
      %p112 = por %p110, %p111
      %p113 = scmp.ne.s32.totalorder %s101, %s102
      %p114 = scmp.eq.s32.totalorder %s29, 1
      %p115 = por %p113, %p114
      %p117 = scmp.ne.s32.totalorder %s102, %s116
      %p118 = scmp.eq.s32.totalorder %s29, 0
      %p119 = por %p117, %p118
      %s121 = sadd.s32 %s120, 1
      %p124 = scmp.eq.s32.totalorder %s23, 1
      %p125 = scmp.ne.s32.totalorder %s120, %s122
      %p126 = scmp.eq.s32.totalorder %s23, 0
      %p127 = por %p125, %p126
      %p128 = scmp.ne.s32.totalorder %s120, %s122
      %p129 = scmp.eq.s32.totalorder %s28, 1
      %p130 = por %p128, %p129
      %p131 = scmp.ne.s32.totalorder %s122, %s123
      %p132 = scmp.eq.s32.totalorder %s28, 0
      %p133 = por %p131, %p132
      %p134 = scmp.ne.s32.totalorder %s122, %s123
      %p135 = scmp.eq.s32.totalorder %s29, 1
      %p136 = por %p134, %p135
      %p138 = scmp.ne.s32.totalorder %s123, %s137
      %p139 = scmp.eq.s32.totalorder %s29, 0
      %p140 = por %p138, %p139
      %s142 = sadd.s32 %s141, 1
      %p145 = scmp.eq.s32.totalorder %s23, 1
      %p146 = scmp.ne.s32.totalorder %s141, %s143
      %p147 = scmp.eq.s32.totalorder %s23, 0
      %p148 = por %p146, %p147
      %p149 = scmp.ne.s32.totalorder %s141, %s143
      %p150 = scmp.eq.s32.totalorder %s28, 1
      %p151 = por %p149, %p150
      %p152 = scmp.ne.s32.totalorder %s143, %s144
      %p153 = scmp.eq.s32.totalorder %s28, 0
      %p154 = por %p152, %p153
      %p155 = scmp.ne.s32.totalorder %s143, %s144
      %p156 = scmp.eq.s32.totalorder %s29, 1
      %p157 = por %p155, %p156
      %p159 = scmp.ne.s32.totalorder %s144, %s158
      %p160 = scmp.eq.s32.totalorder %s29, 0
      %p161 = por %p159, %p160
      %s163 = sadd.s32 %s162, 1
      %p166 = scmp.eq.s32.totalorder %s23, 1
      %p167 = scmp.ne.s32.totalorder %s162, %s164
      %p168 = scmp.eq.s32.totalorder %s23, 0
      %p169 = por %p167, %p168
      %p170 = scmp.ne.s32.totalorder %s162, %s164
      %p171 = scmp.eq.s32.totalorder %s28, 1
      %p172 = por %p170, %p171
      %p173 = scmp.ne.s32.totalorder %s164, %s165
      %p174 = scmp.eq.s32.totalorder %s28, 0
      %p175 = por %p173, %p174
      %p176 = scmp.ne.s32.totalorder %s164, %s165
      %p177 = scmp.eq.s32.totalorder %s29, 1
      %p178 = por %p176, %p177
      %p180 = scmp.ne.s32.totalorder %s165, %s179
      %p181 = scmp.eq.s32.totalorder %s29, 0
      %p182 = por %p180, %p181
      %s184 = sadd.s32 %s183, 1
      %p187 = scmp.eq.s32.totalorder %s23, 1
      %p188 = scmp.ne.s32.totalorder %s183, %s185
      %p189 = scmp.eq.s32.totalorder %s23, 0
      %p190 = por %p188, %p189
      %p191 = scmp.ne.s32.totalorder %s183, %s185
      %p192 = scmp.eq.s32.totalorder %s28, 1
      %p193 = por %p191, %p192
      %p194 = scmp.ne.s32.totalorder %s185, %s186
      %p195 = scmp.eq.s32.totalorder %s28, 0
      %p196 = por %p194, %p195
      %p197 = scmp.ne.s32.totalorder %s185, %s186
      %p198 = scmp.eq.s32.totalorder %s29, 1
      %p199 = por %p197, %p198
      %p201 = scmp.ne.s32.totalorder %s186, %s200
      %p202 = scmp.eq.s32.totalorder %s29, 0
      %p203 = por %p201, %p202
      %s205 = sadd.s32 %s204, 1
      %p208 = scmp.eq.s32.totalorder %s23, 1
      %p209 = scmp.ne.s32.totalorder %s204, %s206
      %p210 = scmp.eq.s32.totalorder %s23, 0
      %p211 = por %p209, %p210
      %p212 = scmp.ne.s32.totalorder %s204, %s206
      %p213 = scmp.eq.s32.totalorder %s28, 1
      %p214 = por %p212, %p213
      %p215 = scmp.ne.s32.totalorder %s206, %s207
      %p216 = scmp.eq.s32.totalorder %s28, 0
      %p217 = por %p215, %p216
      %p218 = scmp.ne.s32.totalorder %s206, %s207
      %p219 = scmp.eq.s32.totalorder %s29, 1
      %p220 = por %p218, %p219
      %p222 = scmp.ne.s32.totalorder %s207, %s221
      %p223 = scmp.eq.s32.totalorder %s29, 0
      %p224 = por %p222, %p223
      %s226 = sadd.s32 %s225, 1
      %p229 = scmp.eq.s32.totalorder %s23, 1
      %p230 = scmp.ne.s32.totalorder %s225, %s227
      %p231 = scmp.eq.s32.totalorder %s23, 0
      %p232 = por %p230, %p231
      %p233 = scmp.ne.s32.totalorder %s225, %s227
      %p234 = scmp.eq.s32.totalorder %s28, 1
      %p235 = por %p233, %p234
      %p236 = scmp.ne.s32.totalorder %s227, %s228
      %p237 = scmp.eq.s32.totalorder %s28, 0
      %p238 = por %p236, %p237
      %p239 = scmp.ne.s32.totalorder %s227, %s228
      %p240 = scmp.eq.s32.totalorder %s29, 1
      %p241 = por %p239, %p240
      %p243 = scmp.ne.s32.totalorder %s228, %s242
      %p244 = scmp.eq.s32.totalorder %s29, 0
      %p245 = por %p243, %p244
      %s247 = sadd.s32 %s246, 1
      %p250 = scmp.eq.s32.totalorder %s23, 1
      %p251 = scmp.ne.s32.totalorder %s246, %s248
      %p252 = scmp.eq.s32.totalorder %s23, 0
      %p253 = por %p251, %p252
      %p254 = scmp.ne.s32.totalorder %s246, %s248
      %p255 = scmp.eq.s32.totalorder %s28, 1
      %p256 = por %p254, %p255
      %p257 = scmp.ne.s32.totalorder %s248, %s249
      %p258 = scmp.eq.s32.totalorder %s28, 0
      %p259 = por %p257, %p258
      %p260 = scmp.ne.s32.totalorder %s248, %s249
      %p261 = scmp.eq.s32.totalorder %s29, 1
      %p262 = por %p260, %p261
      %p264 = scmp.ne.s32.totalorder %s249, %s263
      %p265 = scmp.eq.s32.totalorder %s29, 0
      %p266 = por %p264, %p265
      %s268 = sadd.s32 %s267, 1
      %p271 = scmp.eq.s32.totalorder %s23, 1
      %p272 = scmp.ne.s32.totalorder %s267, %s269
      %p273 = scmp.eq.s32.totalorder %s23, 0
      %p274 = por %p272, %p273
      %p275 = scmp.ne.s32.totalorder %s267, %s269
      %p276 = scmp.eq.s32.totalorder %s28, 1
      %p277 = por %p275, %p276
      %p278 = scmp.ne.s32.totalorder %s269, %s270
      %p279 = scmp.eq.s32.totalorder %s28, 0
      %p280 = por %p278, %p279
      %p281 = scmp.ne.s32.totalorder %s269, %s270
      %p282 = scmp.eq.s32.totalorder %s29, 1
      %p283 = por %p281, %p282
      %p285 = scmp.ne.s32.totalorder %s270, %s284
      %p286 = scmp.eq.s32.totalorder %s29, 0
      %p287 = por %p285, %p286
      %s288 = ssub.s32 %s23, %s30
      %p289 = scmp.eq.s32.totalorder %s288, 0
      %s291 = sadd.s32 %s290, 1
      %s292 = scalar_select %p289, %s290, %s291
      %p295 = pneg %p289
      %p296 = scmp.eq.s32.totalorder %s23, 1
      %p297 = por %p295, %p296
      %p298 = scmp.ne.s32.totalorder %s290, %s293
      %p299 = scmp.eq.s32.totalorder %s23, 0
      %p300 = por %p298, %p299
      %p301 = scmp.ne.s32.totalorder %s290, %s293
      %p302 = scmp.eq.s32.totalorder %s28, 1
      %p303 = por %p301, %p302
      %p304 = scmp.ne.s32.totalorder %s293, %s294
      %p305 = scmp.eq.s32.totalorder %s28, 0
      %p306 = por %p304, %p305
      %p307 = scmp.ne.s32.totalorder %s293, %s294
      %p308 = scmp.eq.s32.totalorder %s29, 1
      %p309 = por %p307, %p308
      %p311 = scmp.ne.s32.totalorder %s294, %s310
      %p312 = scmp.eq.s32.totalorder %s29, 0
      %p313 = por %p311, %p312
      %s314 = ssub.s32 %s23, %s30
      %p315 = scmp.eq.s32.totalorder %s314, 0
      %s317 = sadd.s32 %s316, 1
      %s318 = scalar_select %p315, %s316, %s317
      %p321 = pneg %p315
      %p322 = scmp.eq.s32.totalorder %s23, 1
      %p323 = por %p321, %p322
      %p324 = scmp.ne.s32.totalorder %s316, %s319
      %p325 = scmp.eq.s32.totalorder %s23, 0
      %p326 = por %p324, %p325
      %p327 = scmp.ne.s32.totalorder %s316, %s319
      %p328 = scmp.eq.s32.totalorder %s28, 1
      %p329 = por %p327, %p328
      %p330 = scmp.ne.s32.totalorder %s319, %s320
      %p331 = scmp.eq.s32.totalorder %s28, 0
      %p332 = por %p330, %p331
      %p333 = scmp.ne.s32.totalorder %s319, %s320
      %p334 = scmp.eq.s32.totalorder %s29, 1
      %p335 = por %p333, %p334
      %p337 = scmp.ne.s32.totalorder %s320, %s336
      %p338 = scmp.eq.s32.totalorder %s29, 0
      %p339 = por %p337, %p338
      %p340 = scmp.le.s32.totalorder 1, %s23
      %p341 = scmp.lt.s32.totalorder %s23, 3
      %p342 = pnand %p340, %p341
      %p343 = pneg %p342
      // Predicated region
      $region9: #{tpu_custom_call.1} parent=5 // pred_check
        _
      $region10: #{tpu_custom_call.1} parent=5 // pred_check_branch
        %345 = sbr.rel (%p342) target = $region12
      $region11: #{tpu_custom_call.1} parent=5 // pred_region
        %s346 = ssub.s32 %s23, 1
        // Predicated region
        $region13: #{tpu_custom_call.1} parent=11 // pred_check
          %p347 = pneg %p70
        $region14: #{tpu_custom_call.1} parent=11 // pred_check_branch
          %349 = sbr.rel (%p347) target = $region16
        $region15: #{tpu_custom_call.1} parent=11 // pred_region
          _
        $region16: #{tpu_custom_call.1} parent=11 // pred_fallthru
          _
        // Predicated region
        $region17: #{tpu_custom_call.1} parent=11 // pred_check
          %p350 = pneg %p91
        $region18: #{tpu_custom_call.1} parent=11 // pred_check_branch
          %352 = sbr.rel (%p350) target = $region20
        $region19: #{tpu_custom_call.1} parent=11 // pred_region
          _
        $region20: #{tpu_custom_call.1} parent=11 // pred_fallthru
          _
        // Predicated region
        $region21: #{tpu_custom_call.1} parent=11 // pred_check
          %p353 = pneg %p112
        $region22: #{tpu_custom_call.1} parent=11 // pred_check_branch
          %355 = sbr.rel (%p353) target = $region24
        $region23: #{tpu_custom_call.1} parent=11 // pred_region
          _
        $region24: #{tpu_custom_call.1} parent=11 // pred_fallthru
          _
        // Predicated region
        $region25: #{tpu_custom_call.1} parent=11 // pred_check
          %p356 = pneg %p133
        $region26: #{tpu_custom_call.1} parent=11 // pred_check_branch
          %358 = sbr.rel (%p356) target = $region28
        $region27: #{tpu_custom_call.1} parent=11 // pred_region
          _
        $region28: #{tpu_custom_call.1} parent=11 // pred_fallthru
          _
        // Predicated region
        $region29: #{tpu_custom_call.1} parent=11 // pred_check
          %p359 = pneg %p154
        $region30: #{tpu_custom_call.1} parent=11 // pred_check_branch
          %361 = sbr.rel (%p359) target = $region32
        $region31: #{tpu_custom_call.1} parent=11 // pred_region
          _
        $region32: #{tpu_custom_call.1} parent=11 // pred_fallthru
          _
        // Predicated region
        $region33: #{tpu_custom_call.1} parent=11 // pred_check
          %p362 = pneg %p175
        $region34: #{tpu_custom_call.1} parent=11 // pred_check_branch
          %364 = sbr.rel (%p362) target = $region36
        $region35: #{tpu_custom_call.1} parent=11 // pred_region
          _
        $region36: #{tpu_custom_call.1} parent=11 // pred_fallthru
          _
        // Predicated region
        $region37: #{tpu_custom_call.1} parent=11 // pred_check
          %p365 = pneg %p196
        $region38: #{tpu_custom_call.1} parent=11 // pred_check_branch
          %367 = sbr.rel (%p365) target = $region40
        $region39: #{tpu_custom_call.1} parent=11 // pred_region
          _
        $region40: #{tpu_custom_call.1} parent=11 // pred_fallthru
          _
        // Predicated region
        $region41: #{tpu_custom_call.1} parent=11 // pred_check
          %p368 = pneg %p217
        $region42: #{tpu_custom_call.1} parent=11 // pred_check_branch
          %370 = sbr.rel (%p368) target = $region44
        $region43: #{tpu_custom_call.1} parent=11 // pred_region
          _
        $region44: #{tpu_custom_call.1} parent=11 // pred_fallthru
          _
        // Predicated region
        $region45: #{tpu_custom_call.1} parent=11 // pred_check
          %p371 = pneg %p238
        $region46: #{tpu_custom_call.1} parent=11 // pred_check_branch
          %373 = sbr.rel (%p371) target = $region48
        $region47: #{tpu_custom_call.1} parent=11 // pred_region
          _
        $region48: #{tpu_custom_call.1} parent=11 // pred_fallthru
          _
        // Predicated region
        $region49: #{tpu_custom_call.1} parent=11 // pred_check
          %p374 = pneg %p259
        $region50: #{tpu_custom_call.1} parent=11 // pred_check_branch
          %376 = sbr.rel (%p374) target = $region52
        $region51: #{tpu_custom_call.1} parent=11 // pred_region
          _
        $region52: #{tpu_custom_call.1} parent=11 // pred_fallthru
          _
        // Predicated region
        $region53: #{tpu_custom_call.1} parent=11 // pred_check
          %p377 = pneg %p280
        $region54: #{tpu_custom_call.1} parent=11 // pred_check_branch
          %379 = sbr.rel (%p377) target = $region56
        $region55: #{tpu_custom_call.1} parent=11 // pred_region
          _
        $region56: #{tpu_custom_call.1} parent=11 // pred_fallthru
          _
      $region12: #{tpu_custom_call.1} parent=5 // pred_fallthru
        _
      %p380 = scmp.lt.s32.totalorder %s23, 2
      // Predicated region
      $region57: #{tpu_custom_call.1} parent=5 // pred_check
        %p381 = pneg %p380
      $region58: #{tpu_custom_call.1} parent=5 // pred_check_branch
        %383 = sbr.rel (%p381) target = $region60
      $region59: #{tpu_custom_call.1} parent=5 // pred_region
        // Predicated region
        $region61: #{tpu_custom_call.1} parent=59 // pred_check
          %p384 = pneg %p43
        $region62: #{tpu_custom_call.1} parent=59 // pred_check_branch
          %386 = sbr.rel (%p384) target = $region64
        $region63: #{tpu_custom_call.1} parent=59 // pred_region
          %p387 = scmp.lt.s32.totalorder %s23, 1
          %s388 = scalar_select %p387, %s23, 1
          %s389 = smul.addr %s388, 2
          %s390 = smul.addr %s389, 8
          %s391 = scalar_lea.vmem %s0, %s390
        $region64: #{tpu_custom_call.1} parent=59 // pred_fallthru
          _
      $region60: #{tpu_custom_call.1} parent=5 // pred_fallthru
        _
      %p392 = scmp.le.s32.totalorder 1, %s23
      %p393 = scmp.lt.s32.totalorder %s23, 3
      %p394 = pnand %p392, %p393
      %p395 = pneg %p394
      // Predicated region
      $region65: #{tpu_custom_call.1} parent=5 // pred_check
        _
      $region66: #{tpu_custom_call.1} parent=5 // pred_check_branch
        %397 = sbr.rel (%p394) target = $region68
      $region67: #{tpu_custom_call.1} parent=5 // pred_region
        %s398 = ssub.s32 %s23, 1
        %p399 = scmp.lt.s32.totalorder %s28, 1
        %s400 = scalar_select %p399, %s28, 1
        %s401 = smul.addr %s400, 2
        %s402 = smul.addr %s401, 8
        %s403 = scalar_lea.vmem %s0, %s402
        %p404 = pneg %p49
        %p405 = pneg %p46
        %p406 = pneg %p70
        %p407 = pneg %p67
        %p408 = pneg %p91
        %p409 = pneg %p88
        %p410 = pneg %p112
        %p411 = pneg %p109
        %p412 = pneg %p133
        %p413 = pneg %p130
        %p414 = pneg %p154
        %p415 = pneg %p151
        %p416 = pneg %p175
        %p417 = pneg %p172
        %p418 = pneg %p196
        %p419 = pneg %p193
        %p420 = pneg %p217
        %p421 = pneg %p214
        %p422 = pneg %p238
        %p423 = pneg %p235
        %p424 = pneg %p259
        %p425 = pneg %p256
        %p426 = pneg %p280
        %p427 = pneg %p277
        %p428 = pneg %p306
        %p429 = pneg %p303
        %s430 = sand.u32 %s293, 1
        %s431 = scalar_lea.sflag [#allocation5], %s430
        %s432 = sand.u32 %s293, 1
        %s433 = smul.addr %s432, 8
        %s434 = scalar_lea.vmem [#allocation4], %s433
        %p435 = pneg %p332
        %p436 = pneg %p329
        %p437 = scmp.lt.s32.totalorder %s28, 1
        %s438 = scalar_select %p437, %s28, 1
        %s439 = smul.addr %s438, 4
        %s440 = smul.addr %s439, 8
        %s441 = scalar_lea.vmem %s13, %s440
        %p442 = scmp.lt.s32.totalorder %s28, 1
        %s443 = scalar_select %p442, %s28, 1
        %s444 = smul.addr %s443, 2
        %s445 = smul.addr %s444, 8
        %s446 = scalar_lea.vmem %s0, %s445
        %p447 = scmp.lt.s32.totalorder %s28, 1
        %s448 = scalar_select %p447, %s28, 1
        %s449 = smul.addr %s448, 4
        %s450 = smul.addr %s449, 8
        %s451 = scalar_lea.vmem %s13, %s450
        %453 = vst [vmem:[#allocation2] sm:$0xff] 0.0
        %454 = vst [vmem:[#allocation2 + $0x18] sm:$0xff] 0.0
        %v455 = vlaneseq
        %v456 = vand.u32 %v455, 127
        %v457 = vadd.s32 %v456, 128
        %vm458 = vcmp.lt.s32.totalorder %v456, 0
        %v459 = vsub.s32 0, %v456
        %v460 = vsel %vm458, %v459, %v456
        %v461 = vshrl.u32 %v460, 4
        %v462 = vand.u32 %v460, 15
        %v463 = vsub.s32 0, %v462
        %v464 = vsel %vm458, %v463, %v462
        %vm465 = vcmp.lt.s32.totalorder %v457, 0
        %v466 = vsub.s32 0, %v457
        %v467 = vsel %vm465, %v466, %v457
        %v468 = vshrl.u32 %v467, 4
        %v469 = vand.u32 %v467, 15
        %v470 = vsub.s32 0, %v469
        %v471 = vsel %vm465, %v470, %v469
        %vm472 = vcmp.ne.s32.totalorder %v464, 0
        %vm473 = vcmp.ne.s32.totalorder %v471, 0
        %vm474 = vcmp.lt.s32.totalorder %v464, 0
        %vm475 = vcmp.lt.s32.totalorder %v471, 0
        %vm476 = vmand %vm474, %vm472
        %vm477 = vmand %vm475, %vm473
        %v478 = vadd.s32 %v464, 16
        %v479 = vadd.s32 %v471, 16
        %v480 = vsel %vm476, %v478, %v464
        %v481 = vsel %vm477, %v479, %v471
        %vm482 = vcmp.lt.s32.totalorder %v480, 15
        %vm483 = vcmp.lt.s32.totalorder %v481, 15
        %v484 = vsel %vm482, 1, 0
        %v485 = vsel %vm483, 1, 0
        %v486 = vcvt.s32.f32 %v484
        %v487 = vcvt.s32.f32 %v485
        %vm488 = vcmp.gt.s32.totalorder %v480, 0
        %vm489 = vcmp.gt.s32.totalorder %v481, 0
        %v490 = vsel %vm488, 1, 0
        %v491 = vsel %vm489, 1, 0
        %v492 = vcvt.s32.f32 %v490
        %v493 = vcvt.s32.f32 %v491
        %v494 = vld [vmem:[%s446] sm:$0xff]
        %v495 = vld [vmem:[%s446 + $0x8] sm:$0xff]
        %496 = vst [vmem:[#allocation2 + $0x8] sm:$0xff] %v494
        %497 = vst [vmem:[#allocation2 + $0x10] sm:$0xff] %v495
        %v498 = vld [vmem:[#allocation2] sm:$0xff]
        %v499 = vld [vmem:[#allocation2 + $0x8] sm:$0xff]
        %v500 = vld [vmem:[#allocation2 + $0x10] sm:$0xff]
        %503 = vrot.lane.b32.xlu0 %v492, 111
        %v504 = vpop.permute.xlu0 %503
        %505 = vrot.lane.b32.xlu0 %v493, 111
        %v506 = vpop.permute.xlu0 %505
        %vm507 = vcmask 908288
        %v508 = vsel %vm507, %v504, %v506
        %v512 = vmul.f32 %v498, %v504
        %v513 = vmul.f32 %v499, %v508
        %v514 = vmul.f32 %v500, %v506
        %518 = vrot.lane.b32.xlu0 %v512, 17
        %v519 = vpop.permute.xlu0 %518
        %520 = vrot.lane.b32.xlu0 %v513, 17
        %v521 = vpop.permute.xlu0 %520
        %522 = vrot.lane.b32.xlu0 %v514, 17
        %v523 = vpop.permute.xlu0 %522
        %vm524 = vcmask 138240
        %v525 = vsel %vm524, %v519, %v521
        %v526 = vsel %vm524, %v521, %v523
        %529 = vst [vmem:[#allocation3] sm:$0xff] %v525
        %530 = vst [vmem:[#allocation3 + $0x8] sm:$0xff] %v526
        %v531 = vld [vmem:[#allocation2] sm:$0xff]
        %v532 = vld [vmem:[#allocation2 + $0x8] sm:$0xff]
        %v533 = vld [vmem:[#allocation2 + $0x10] sm:$0xff]
        %537 = vrot.lane.b32.xlu0 %v531, 16
        %v538 = vpop.permute.xlu0 %537
        %539 = vrot.lane.b32.xlu0 %v532, 16
        %v540 = vpop.permute.xlu0 %539
        %541 = vrot.lane.b32.xlu0 %v533, 16
        %v542 = vpop.permute.xlu0 %541
        %vm543 = vcmask 130048
        %v544 = vsel %vm543, %v538, %v540
        %v545 = vsel %vm543, %v540, %v542
        %548 = vst [vmem:[#allocation3 + $0x10] sm:$0xff] %v544
        %549 = vst [vmem:[#allocation3 + $0x18] sm:$0xff] %v545
        %v550 = vld [vmem:[#allocation2] sm:$0xff]
        %v551 = vld [vmem:[#allocation2 + $0x8] sm:$0xff]
        %v552 = vld [vmem:[#allocation2 + $0x10] sm:$0xff]
        %555 = vrot.lane.b32.xlu0 %v486, 113
        %v556 = vpop.permute.xlu0 %555
        %557 = vrot.lane.b32.xlu0 %v487, 113
        %v558 = vpop.permute.xlu0 %557
        %vm559 = vcmask 924672
        %v560 = vsel %vm559, %v556, %v558
        %v564 = vmul.f32 %v550, %v556
        %v565 = vmul.f32 %v551, %v560
        %v566 = vmul.f32 %v552, %v558
        %570 = vrot.lane.b32.xlu0 %v564, 15
        %v571 = vpop.permute.xlu0 %570
        %572 = vrot.lane.b32.xlu0 %v565, 15
        %v573 = vpop.permute.xlu0 %572
        %574 = vrot.lane.b32.xlu0 %v566, 15
        %v575 = vpop.permute.xlu0 %574
        %vm576 = vcmask 121856
        %v577 = vsel %vm576, %v571, %v573
        %v578 = vsel %vm576, %v573, %v575
        %581 = vst [vmem:[#allocation3 + $0x20] sm:$0xff] %v577
        %582 = vst [vmem:[#allocation3 + $0x28] sm:$0xff] %v578
        %v583 = vld [vmem:[#allocation2] sm:$0xff]
        %v584 = vld [vmem:[#allocation2 + $0x8] sm:$0xff]
        %v585 = vld [vmem:[#allocation2 + $0x10] sm:$0xff]
        %586 = vrot.lane.b32.xlu0 %v492, 127
        %v587 = vpop.permute.xlu0 %586
        %588 = vrot.lane.b32.xlu0 %v493, 127
        %v589 = vpop.permute.xlu0 %588
        %vm590 = vcmask 1039360
        %v591 = vsel %vm590, %v587, %v589
        %v595 = vmul.f32 %v583, %v587
        %v596 = vmul.f32 %v584, %v591
        %v597 = vmul.f32 %v585, %v589
        %601 = vrot.lane.b32.xlu0 %v595, 1
        %v602 = vpop.permute.xlu0 %601
        %603 = vrot.lane.b32.xlu0 %v596, 1
        %v604 = vpop.permute.xlu0 %603
        %605 = vrot.lane.b32.xlu0 %v597, 1
        %v606 = vpop.permute.xlu0 %605
        %vm607 = vcmask 7168
        %v608 = vsel %vm607, %v602, %v604
        %v609 = vsel %vm607, %v604, %v606
        %612 = vst [vmem:[#allocation3 + $0x30] sm:$0xff] %v608
        %613 = vst [vmem:[#allocation3 + $0x38] sm:$0xff] %v609
        %v614 = vld [vmem:[#allocation2 + $0x8] sm:$0xff]
        %v615 = vld [vmem:[#allocation2 + $0x10] sm:$0xff]
        %616 = vst [vmem:[#allocation3 + $0x40] sm:$0xff] %v614
        %617 = vst [vmem:[#allocation3 + $0x48] sm:$0xff] %v615
        %v618 = vld [vmem:[#allocation2 + $0x8] sm:$0xff]
        %v619 = vld [vmem:[#allocation2 + $0x10] sm:$0xff]
        %v620 = vld [vmem:[#allocation2 + $0x18] sm:$0xff]
        %621 = vrot.lane.b32.xlu0 %v486, 1
        %v622 = vpop.permute.xlu0 %621
        %623 = vrot.lane.b32.xlu0 %v487, 1
        %v624 = vpop.permute.xlu0 %623
        %v625 = vsel %vm607, %v622, %v624
        %v629 = vmul.f32 %v618, %v622
        %v630 = vmul.f32 %v619, %v625
        %v631 = vmul.f32 %v620, %v624
        %635 = vrot.lane.b32.xlu0 %v629, 127
        %v636 = vpop.permute.xlu0 %635
        %637 = vrot.lane.b32.xlu0 %v630, 127
        %v638 = vpop.permute.xlu0 %637
        %639 = vrot.lane.b32.xlu0 %v631, 127
        %v640 = vpop.permute.xlu0 %639
        %v641 = vsel %vm590, %v636, %v638
        %v642 = vsel %vm590, %v638, %v640
        %645 = vst [vmem:[#allocation3 + $0x50] sm:$0xff] %v641
        %646 = vst [vmem:[#allocation3 + $0x58] sm:$0xff] %v642
        %v647 = vld [vmem:[#allocation2 + $0x8] sm:$0xff]
        %v648 = vld [vmem:[#allocation2 + $0x10] sm:$0xff]
        %v649 = vld [vmem:[#allocation2 + $0x18] sm:$0xff]
        %650 = vrot.lane.b32.xlu0 %v492, 15
        %v651 = vpop.permute.xlu0 %650
        %652 = vrot.lane.b32.xlu0 %v493, 15
        %v653 = vpop.permute.xlu0 %652
        %v654 = vsel %vm576, %v651, %v653
        %v658 = vmul.f32 %v647, %v651
        %v659 = vmul.f32 %v648, %v654
        %v660 = vmul.f32 %v649, %v653
        %664 = vrot.lane.b32.xlu0 %v658, 113
        %v665 = vpop.permute.xlu0 %664
        %666 = vrot.lane.b32.xlu0 %v659, 113
        %v667 = vpop.permute.xlu0 %666
        %668 = vrot.lane.b32.xlu0 %v660, 113
        %v669 = vpop.permute.xlu0 %668
        %v670 = vsel %vm559, %v665, %v667
        %v671 = vsel %vm559, %v667, %v669
        %674 = vst [vmem:[#allocation3 + $0x60] sm:$0xff] %v670
        %675 = vst [vmem:[#allocation3 + $0x68] sm:$0xff] %v671
        %v676 = vld [vmem:[#allocation2 + $0x8] sm:$0xff]
        %v677 = vld [vmem:[#allocation2 + $0x10] sm:$0xff]
        %v678 = vld [vmem:[#allocation2 + $0x18] sm:$0xff]
        %682 = vrot.lane.b32.xlu0 %v676, 112
        %v683 = vpop.permute.xlu0 %682
        %684 = vrot.lane.b32.xlu0 %v677, 112
        %v685 = vpop.permute.xlu0 %684
        %686 = vrot.lane.b32.xlu0 %v678, 112
        %v687 = vpop.permute.xlu0 %686
        %vm688 = vcmask 916480
        %v689 = vsel %vm688, %v683, %v685
        %v690 = vsel %vm688, %v685, %v687
        %693 = vst [vmem:[#allocation3 + $0x70] sm:$0xff] %v689
        %694 = vst [vmem:[#allocation3 + $0x78] sm:$0xff] %v690
        %v695 = vld [vmem:[#allocation2 + $0x8] sm:$0xff]
        %v696 = vld [vmem:[#allocation2 + $0x10] sm:$0xff]
        %v697 = vld [vmem:[#allocation2 + $0x18] sm:$0xff]
        %698 = vrot.lane.b32.xlu0 %v486, 17
        %v699 = vpop.permute.xlu0 %698
        %700 = vrot.lane.b32.xlu0 %v487, 17
        %v701 = vpop.permute.xlu0 %700
        %v702 = vsel %vm524, %v699, %v701
        %v706 = vmul.f32 %v695, %v699
        %v707 = vmul.f32 %v696, %v702
        %v708 = vmul.f32 %v697, %v701
        %712 = vrot.lane.b32.xlu0 %v706, 111
        %v713 = vpop.permute.xlu0 %712
        %714 = vrot.lane.b32.xlu0 %v707, 111
        %v715 = vpop.permute.xlu0 %714
        %716 = vrot.lane.b32.xlu0 %v708, 111
        %v717 = vpop.permute.xlu0 %716
        %v718 = vsel %vm507, %v713, %v715
        %v719 = vsel %vm507, %v715, %v717
        %722 = vst [vmem:[#allocation3 + $0x80] sm:$0xff] %v718
        %723 = vst [vmem:[#allocation3 + $0x88] sm:$0xff] %v719
        %v724 = vld [vmem:[#allocation3] sm:$0xff]
        %v725 = vld [vmem:[#allocation3 + $0x8] sm:$0xff]
        %v726 = vld [vmem:[#allocation3 + $0x10] sm:$0xff]
        %v727 = vld [vmem:[#allocation3 + $0x18] sm:$0xff]
        %v728 = vld [vmem:[#allocation3 + $0x20] sm:$0xff]
        %v729 = vld [vmem:[#allocation3 + $0x28] sm:$0xff]
        %v730 = vld [vmem:[#allocation3 + $0x30] sm:$0xff]
        %v731 = vld [vmem:[#allocation3 + $0x38] sm:$0xff]
        %v732 = vld [vmem:[#allocation3 + $0x40] sm:$0xff]
        %v733 = vld [vmem:[#allocation3 + $0x48] sm:$0xff]
        %v734 = vld [vmem:[#allocation3 + $0x50] sm:$0xff]
        %v735 = vld [vmem:[#allocation3 + $0x58] sm:$0xff]
        %v736 = vld [vmem:[#allocation3 + $0x60] sm:$0xff]
        %v737 = vld [vmem:[#allocation3 + $0x68] sm:$0xff]
        %v738 = vld [vmem:[#allocation3 + $0x70] sm:$0xff]
        %v739 = vld [vmem:[#allocation3 + $0x78] sm:$0xff]
        %v740 = vld [vmem:[#allocation3 + $0x80] sm:$0xff]
        %v741 = vld [vmem:[#allocation3 + $0x88] sm:$0xff]
        %v742 = vpack.c.bf16 %v726, %v724
        %v743 = vpack.c.bf16 %v727, %v725
        %v744 = vpack.c.bf16 %v730, %v728
        %v745 = vpack.c.bf16 %v731, %v729
        %v746 = vpack.c.bf16 %v734, %v732
        %v747 = vpack.c.bf16 %v735, %v733
        %v748 = vpack.c.bf16 %v738, %v736
        %v749 = vpack.c.bf16 %v739, %v737
        %v750 = vpack.c.bf16 %v740, %v740
        %v751 = vpack.c.bf16 %v741, %v741
        %v752 = vld [vmem:[%s2] sm:$0xf]
        %v753 = vld [vmem:[%s3] sm:$0xff]
        %755 = vset.pattern.permute.xlu0 0
        %756 = vperm.xlu0 %755, %v753
        %v757 = vpop.permute.xlu0 %756
        %vm759 = vcmask 588800
        %v761 = vsel %vm759, %v752, 0
        %vm763 = vcmask 1043456
        %v765 = vsel %vm763, %v750, 0
        %v768 = vsel %vm763, %v751, 0
        %770 = vmatpush.bf16.msra.mxu0 0
        %771 = vmatpush.bf16.msra.mxu0 0
        %772 = vmatpush.bf16.msra.mxu0 0
        %773 = vmatpush.bf16.msra.mxu0 %v765
        %774 = vmatpush.bf16.msra.mxu0 %v748
        %775 = vmatpush.bf16.msra.mxu0 %v746
        %776 = vmatpush.bf16.msra.mxu0 %v744
        %777 = vmatpush.bf16.msra.mxu0 %v742
        %778 = vmatmul.bf16.gmra.mxu0 %v761
        %v779 = vpop.f32.mrf.mxu0
        %v780 = vadd.f32 %v757, %v779
        %v781 = vpop.f32.mrf.mxu0
        %782 = vdwg.mxu0
        %783 = vmatpush.bf16.msra.mxu0 0
        %784 = vmatpush.bf16.msra.mxu0 0
        %785 = vmatpush.bf16.msra.mxu0 0
        %786 = vmatpush.bf16.msra.mxu0 %v768
        %787 = vmatpush.bf16.msra.mxu0 %v749
        %788 = vmatpush.bf16.msra.mxu0 %v747
        %789 = vmatpush.bf16.msra.mxu0 %v745
        %790 = vmatpush.bf16.msra.mxu0 %v743
        %791 = vmatmul.bf16.gmra.mxu0 %v761
        %v792 = vpop.f32.mrf.mxu0
        %v793 = vadd.f32 %v757, %v792
        %v794 = vpop.f32.mrf.mxu0
        %795 = vdwg.mxu0
        %vm796 = vcmp.ge.f32.partialorder %v780, 0.0
        %vm797 = vcmp.ge.f32.partialorder %v793, 0.0
        %v798 = vmul.f32 %v780, 0.2
        %v799 = vmul.f32 %v793, 0.2
        %v800 = vsel %vm796, %v780, %v798
        %v801 = vsel %vm797, %v793, %v799
        %v802 = vadd.f32 %v800, %v801
        %803 = vadd.xlane.f32.xlu0 %v802
        %v804 = vpop.xlane.xlu0 %803
        %v805 = vrcp.pop 256.0
        %v806 = vmul.f32 256.0, %v805
        %v807 = vsub.f32 1.0, %v806
        %v808 = vmul.f32 %v805, %v807
        %v809 = vadd.f32 %v805, %v808
        %vm810 = vweird.f32 %v805
        %v811 = vsel %vm810, %v805, %v809
        %v812 = vmul.f32 %v804, %v811
        %v813 = vsub.f32 %v800, %v812
        %v814 = vsub.f32 %v801, %v812
        %v815 = vmul.f32 %v813, %v813
        %v816 = vmul.f32 %v814, %v814
        %v817 = vadd.f32 %v815, %v816
        %818 = vadd.xlane.f32.xlu0 %v817
        %v819 = vpop.xlane.xlu0 %818
        %v820 = vmul.f32 %v819, %v811
        %v821 = vadd.f32 %v820, 1e-08
        %v822 = vrsqrt.pop %v821
        %v823 = vmul.f32 %v822, %v821
        %v824 = vmul.f32 %v823, %v822
        %v825 = vmul.f32 0.5, %v824
        %v826 = vsub.f32 1.5, %v825
        %v827 = vmul.f32 %v822, %v826
        %v828 = vmul.f32 %v821, %v827
        %vm829 = vcmp.eq.f32.partialorder %v821, inf
        %v830 = vsel %vm829, %v821, %v828
        %vm831 = vcmp.eq.f32.partialorder %v821, 0.0
        %v832 = vand.u32 %v821, 2147483648
        %v833 = vsel %vm831, %v832, %v830
        %v834 = vrcp.pop %v833
        %v835 = vmul.f32 %v833, %v834
        %v836 = vsub.f32 1.0, %v835
        %v837 = vmul.f32 %v834, %v836
        %v838 = vadd.f32 %v834, %v837
        %vm839 = vweird.f32 %v833
        %vm840 = vweird.f32 %v834
        %vm841 = vmor %vm839, %vm840
        %v842 = vsel %vm841, %v834, %v838
        %v843 = vand.u32 2147483647, %v833
        %vm844 = vcmp.eq.f32.partialorder %v843, 8.507059e+37
        %v845 = vand.u32 %v833, 2147483648
        %v846 = vor.u32 1.1754944e-38, %v845
        %v847 = vsel %vm844, %v846, %v842
        %v848 = vmul.f32 %v813, %v847
        %v849 = vmul.f32 %v814, %v847
        %v850 = vld [vmem:[%s6] sm:$0xff]
        %v851 = vld [vmem:[%s6 + $0x8] sm:$0xff]
        %v852 = vld [vmem:[%s7] sm:$0xff]
        %v853 = vld [vmem:[%s7 + $0x8] sm:$0xff]
        %vm854 = vcmask 64512
        %v856 = vsel %vm854, %v852, 0
        %v859 = vsel %vm854, %v853, 0
        %861 = vmatpush.msra.mxu0 0.0
        %862 = vmatpush.msra.mxu0 0.0
        %863 = vmatpush.msra.mxu0 0.0
        %864 = vmatpush.msra.mxu0 0.0
        %865 = vmatpush.msra.mxu0 0.0
        %866 = vmatpush.msra.mxu0 0.0
        %867 = vmatpush.msra.mxu0 0.0
        %868 = vmatpush.msra.mxu0 0.0
        %869 = vmatpush.msra.mxu0 0.0
        %870 = vmatpush.msra.mxu0 0.0
        %871 = vmatpush.msra.mxu0 0.0
        %872 = vmatpush.msra.mxu0 0.0
        %873 = vmatpush.msra.mxu0 0.0
        %874 = vmatpush.msra.mxu0 0.0
        %875 = vmatpush.msra.mxu0 0.0
        %876 = vmatpush.msra.mxu0 %v833
        %877 = vmatmul.f32.gmra.mxu0 %v856
        %v878 = vpop.f32.mrf.mxu0
        %v879 = vadd.f32 0.0, %v878
        %880 = vmatmul.f32.gmra.mxu0 %v859
        %v881 = vpop.f32.mrf.mxu0
        %v882 = vadd.f32 0.0, %v881
        %883 = vdwg.mxu0
        %v885 = vsel %vm854, %v850, 0
        %v888 = vsel %vm854, %v851, 0
        %890 = vmatpush.msra.mxu0 0.0
        %891 = vmatpush.msra.mxu0 0.0
        %892 = vmatpush.msra.mxu0 0.0
        %893 = vmatpush.msra.mxu0 0.0
        %894 = vmatpush.msra.mxu0 0.0
        %895 = vmatpush.msra.mxu0 0.0
        %896 = vmatpush.msra.mxu0 0.0
        %897 = vmatpush.msra.mxu0 0.0
        %898 = vmatpush.msra.mxu0 0.0
        %899 = vmatpush.msra.mxu0 0.0
        %900 = vmatpush.msra.mxu0 0.0
        %901 = vmatpush.msra.mxu0 0.0
        %902 = vmatpush.msra.mxu0 0.0
        %903 = vmatpush.msra.mxu0 0.0
        %904 = vmatpush.msra.mxu0 0.0
        %905 = vmatpush.msra.mxu0 %v812
        %906 = vmatmul.f32.gmra.mxu0 %v885
        %v907 = vpop.f32.mrf.mxu0
        %v908 = vadd.f32 %v879, %v907
        %909 = vmatmul.f32.gmra.mxu0 %v888
        %v910 = vpop.f32.mrf.mxu0
        %v911 = vadd.f32 %v882, %v910
        %912 = vdwg.mxu0
        %v913 = vld [vmem:[%s8] sm:$0xff]
        %v914 = vld [vmem:[%s8 + $0x8] sm:$0xff]
        %v915 = vadd.f32 %v908, %v913
        %v916 = vadd.f32 %v911, %v914
        %917 = vst [vmem:[#allocation2 + $0x8] sm:$0xff] %v848
        %918 = vst [vmem:[#allocation2 + $0x10] sm:$0xff] %v849
        %v919 = vld [vmem:[#allocation2] sm:$0xff]
        %v920 = vld [vmem:[#allocation2 + $0x8] sm:$0xff]
        %v921 = vld [vmem:[#allocation2 + $0x10] sm:$0xff]
        %v922 = vmul.f32 %v919, %v504
        %v923 = vmul.f32 %v920, %v508
        %v924 = vmul.f32 %v921, %v506
        %928 = vrot.lane.b32.xlu0 %v922, 17
        %v929 = vpop.permute.xlu0 %928
        %930 = vrot.lane.b32.xlu0 %v923, 17
        %v931 = vpop.permute.xlu0 %930
        %932 = vrot.lane.b32.xlu0 %v924, 17
        %v933 = vpop.permute.xlu0 %932
        %v934 = vsel %vm524, %v929, %v931
        %v935 = vsel %vm524, %v931, %v933
        %938 = vst [vmem:[#allocation3] sm:$0xff] %v934
        %939 = vst [vmem:[#allocation3 + $0x8] sm:$0xff] %v935
        %v940 = vld [vmem:[#allocation2] sm:$0xff]
        %v941 = vld [vmem:[#allocation2 + $0x8] sm:$0xff]
        %v942 = vld [vmem:[#allocation2 + $0x10] sm:$0xff]
        %946 = vrot.lane.b32.xlu0 %v940, 16
        %v947 = vpop.permute.xlu0 %946
        %948 = vrot.lane.b32.xlu0 %v941, 16
        %v949 = vpop.permute.xlu0 %948
        %950 = vrot.lane.b32.xlu0 %v942, 16
        %v951 = vpop.permute.xlu0 %950
        %v952 = vsel %vm543, %v947, %v949
        %v953 = vsel %vm543, %v949, %v951
        %956 = vst [vmem:[#allocation3 + $0x10] sm:$0xff] %v952
        %957 = vst [vmem:[#allocation3 + $0x18] sm:$0xff] %v953
        %v958 = vld [vmem:[#allocation2] sm:$0xff]
        %v959 = vld [vmem:[#allocation2 + $0x8] sm:$0xff]
        %v960 = vld [vmem:[#allocation2 + $0x10] sm:$0xff]
        %v961 = vmul.f32 %v958, %v556
        %v962 = vmul.f32 %v959, %v560
        %v963 = vmul.f32 %v960, %v558
        %967 = vrot.lane.b32.xlu0 %v961, 15
        %v968 = vpop.permute.xlu0 %967
        %969 = vrot.lane.b32.xlu0 %v962, 15
        %v970 = vpop.permute.xlu0 %969
        %971 = vrot.lane.b32.xlu0 %v963, 15
        %v972 = vpop.permute.xlu0 %971
        %v973 = vsel %vm576, %v968, %v970
        %v974 = vsel %vm576, %v970, %v972
        %977 = vst [vmem:[#allocation3 + $0x20] sm:$0xff] %v973
        %978 = vst [vmem:[#allocation3 + $0x28] sm:$0xff] %v974
        %v979 = vld [vmem:[#allocation2] sm:$0xff]
        %v980 = vld [vmem:[#allocation2 + $0x8] sm:$0xff]
        %v981 = vld [vmem:[#allocation2 + $0x10] sm:$0xff]
        %v982 = vmul.f32 %v979, %v587
        %v983 = vmul.f32 %v980, %v591
        %v984 = vmul.f32 %v981, %v589
        %988 = vrot.lane.b32.xlu0 %v982, 1
        %v989 = vpop.permute.xlu0 %988
        %990 = vrot.lane.b32.xlu0 %v983, 1
        %v991 = vpop.permute.xlu0 %990
        %992 = vrot.lane.b32.xlu0 %v984, 1
        %v993 = vpop.permute.xlu0 %992
        %v994 = vsel %vm607, %v989, %v991
        %v995 = vsel %vm607, %v991, %v993
        %998 = vst [vmem:[#allocation3 + $0x30] sm:$0xff] %v994
        %999 = vst [vmem:[#allocation3 + $0x38] sm:$0xff] %v995
        %v1000 = vld [vmem:[#allocation2 + $0x8] sm:$0xff]
        %v1001 = vld [vmem:[#allocation2 + $0x10] sm:$0xff]
        %1002 = vst [vmem:[#allocation3 + $0x40] sm:$0xff] %v1000
        %1003 = vst [vmem:[#allocation3 + $0x48] sm:$0xff] %v1001
        %v1004 = vld [vmem:[#allocation2 + $0x8] sm:$0xff]
        %v1005 = vld [vmem:[#allocation2 + $0x10] sm:$0xff]
        %v1006 = vld [vmem:[#allocation2 + $0x18] sm:$0xff]
        %v1007 = vmul.f32 %v1004, %v622
        %v1008 = vmul.f32 %v1005, %v625
        %v1009 = vmul.f32 %v1006, %v624
        %1013 = vrot.lane.b32.xlu0 %v1007, 127
        %v1014 = vpop.permute.xlu0 %1013
        %1015 = vrot.lane.b32.xlu0 %v1008, 127
        %v1016 = vpop.permute.xlu0 %1015
        %1017 = vrot.lane.b32.xlu0 %v1009, 127
        %v1018 = vpop.permute.xlu0 %1017
        %v1019 = vsel %vm590, %v1014, %v1016
        %v1020 = vsel %vm590, %v1016, %v1018
        %1023 = vst [vmem:[#allocation3 + $0x50] sm:$0xff] %v1019
        %1024 = vst [vmem:[#allocation3 + $0x58] sm:$0xff] %v1020
        %v1025 = vld [vmem:[#allocation2 + $0x8] sm:$0xff]
        %v1026 = vld [vmem:[#allocation2 + $0x10] sm:$0xff]
        %v1027 = vld [vmem:[#allocation2 + $0x18] sm:$0xff]
        %v1028 = vmul.f32 %v1025, %v651
        %v1029 = vmul.f32 %v1026, %v654
        %v1030 = vmul.f32 %v1027, %v653
        %1034 = vrot.lane.b32.xlu0 %v1028, 113
        %v1035 = vpop.permute.xlu0 %1034
        %1036 = vrot.lane.b32.xlu0 %v1029, 113
        %v1037 = vpop.permute.xlu0 %1036
        %1038 = vrot.lane.b32.xlu0 %v1030, 113
        %v1039 = vpop.permute.xlu0 %1038
        %v1040 = vsel %vm559, %v1035, %v1037
        %v1041 = vsel %vm559, %v1037, %v1039
        %1044 = vst [vmem:[#allocation3 + $0x60] sm:$0xff] %v1040
        %1045 = vst [vmem:[#allocation3 + $0x68] sm:$0xff] %v1041
        %v1046 = vld [vmem:[#allocation2 + $0x8] sm:$0xff]
        %v1047 = vld [vmem:[#allocation2 + $0x10] sm:$0xff]
        %v1048 = vld [vmem:[#allocation2 + $0x18] sm:$0xff]
        %1052 = vrot.lane.b32.xlu0 %v1046, 112
        %v1053 = vpop.permute.xlu0 %1052
        %1054 = vrot.lane.b32.xlu0 %v1047, 112
        %v1055 = vpop.permute.xlu0 %1054
        %1056 = vrot.lane.b32.xlu0 %v1048, 112
        %v1057 = vpop.permute.xlu0 %1056
        %v1058 = vsel %vm688, %v1053, %v1055
        %v1059 = vsel %vm688, %v1055, %v1057
        %1062 = vst [vmem:[#allocation3 + $0x70] sm:$0xff] %v1058
        %1063 = vst [vmem:[#allocation3 + $0x78] sm:$0xff] %v1059
        %v1064 = vld [vmem:[#allocation2 + $0x8] sm:$0xff]
        %v1065 = vld [vmem:[#allocation2 + $0x10] sm:$0xff]
        %v1066 = vld [vmem:[#allocation2 + $0x18] sm:$0xff]
        %v1067 = vmul.f32 %v1064, %v699
        %v1068 = vmul.f32 %v1065, %v702
        %v1069 = vmul.f32 %v1066, %v701
        %1073 = vrot.lane.b32.xlu0 %v1067, 111
        %v1074 = vpop.permute.xlu0 %1073
        %1075 = vrot.lane.b32.xlu0 %v1068, 111
        %v1076 = vpop.permute.xlu0 %1075
        %1077 = vrot.lane.b32.xlu0 %v1069, 111
        %v1078 = vpop.permute.xlu0 %1077
        %v1079 = vsel %vm507, %v1074, %v1076
        %v1080 = vsel %vm507, %v1076, %v1078
        %1083 = vst [vmem:[#allocation3 + $0x80] sm:$0xff] %v1079
        %1084 = vst [vmem:[#allocation3 + $0x88] sm:$0xff] %v1080
        %v1085 = vld [vmem:[#allocation3] sm:$0xff]
        %v1086 = vld [vmem:[#allocation3 + $0x8] sm:$0xff]
        %v1087 = vld [vmem:[#allocation3 + $0x10] sm:$0xff]
        %v1088 = vld [vmem:[#allocation3 + $0x18] sm:$0xff]
        %v1089 = vld [vmem:[#allocation3 + $0x20] sm:$0xff]
        %v1090 = vld [vmem:[#allocation3 + $0x28] sm:$0xff]
        %v1091 = vld [vmem:[#allocation3 + $0x30] sm:$0xff]
        %v1092 = vld [vmem:[#allocation3 + $0x38] sm:$0xff]
        %v1093 = vld [vmem:[#allocation3 + $0x40] sm:$0xff]
        %v1094 = vld [vmem:[#allocation3 + $0x48] sm:$0xff]
        %v1095 = vld [vmem:[#allocation3 + $0x50] sm:$0xff]
        %v1096 = vld [vmem:[#allocation3 + $0x58] sm:$0xff]
        %v1097 = vld [vmem:[#allocation3 + $0x60] sm:$0xff]
        %v1098 = vld [vmem:[#allocation3 + $0x68] sm:$0xff]
        %v1099 = vld [vmem:[#allocation3 + $0x70] sm:$0xff]
        %v1100 = vld [vmem:[#allocation3 + $0x78] sm:$0xff]
        %v1101 = vld [vmem:[#allocation3 + $0x80] sm:$0xff]
        %v1102 = vld [vmem:[#allocation3 + $0x88] sm:$0xff]
        %v1103 = vpack.c.bf16 %v1087, %v1085
        %v1104 = vpack.c.bf16 %v1088, %v1086
        %v1105 = vpack.c.bf16 %v1091, %v1089
        %v1106 = vpack.c.bf16 %v1092, %v1090
        %v1107 = vpack.c.bf16 %v1095, %v1093
        %v1108 = vpack.c.bf16 %v1096, %v1094
        %v1109 = vpack.c.bf16 %v1099, %v1097
        %v1110 = vpack.c.bf16 %v1100, %v1098
        %v1111 = vpack.c.bf16 %v1101, %v1101
        %v1112 = vpack.c.bf16 %v1102, %v1102
        %v1113 = vld [vmem:[%s4] sm:$0xf]
        %v1114 = vld [vmem:[%s5] sm:$0xff]
        %1116 = vset.pattern.permute.xlu0 0
        %1117 = vperm.xlu0 %1116, %v1114
        %v1118 = vpop.permute.xlu0 %1117
        %v1121 = vsel %vm759, %v1113, 0
        %v1124 = vsel %vm763, %v1111, 0
        %v1127 = vsel %vm763, %v1112, 0
        %1129 = vmatpush.bf16.msra.mxu0 0
        %1130 = vmatpush.bf16.msra.mxu0 0
        %1131 = vmatpush.bf16.msra.mxu0 0
        %1132 = vmatpush.bf16.msra.mxu0 %v1124
        %1133 = vmatpush.bf16.msra.mxu0 %v1109
        %1134 = vmatpush.bf16.msra.mxu0 %v1107
        %1135 = vmatpush.bf16.msra.mxu0 %v1105
        %1136 = vmatpush.bf16.msra.mxu0 %v1103
        %1137 = vmatmul.bf16.gmra.mxu0 %v1121
        %v1138 = vpop.f32.mrf.mxu0
        %v1139 = vadd.f32 %v1118, %v1138
        %v1140 = vpop.f32.mrf.mxu0
        %1141 = vdwg.mxu0
        %1142 = vmatpush.bf16.msra.mxu0 0
        %1143 = vmatpush.bf16.msra.mxu0 0
        %1144 = vmatpush.bf16.msra.mxu0 0
        %1145 = vmatpush.bf16.msra.mxu0 %v1127
        %1146 = vmatpush.bf16.msra.mxu0 %v1110
        %1147 = vmatpush.bf16.msra.mxu0 %v1108
        %1148 = vmatpush.bf16.msra.mxu0 %v1106
        %1149 = vmatpush.bf16.msra.mxu0 %v1104
        %1150 = vmatmul.bf16.gmra.mxu0 %v1121
        %v1151 = vpop.f32.mrf.mxu0
        %v1152 = vadd.f32 %v1118, %v1151
        %v1153 = vpop.f32.mrf.mxu0
        %1154 = vdwg.mxu0
        %vm1155 = vcmp.ge.f32.partialorder %v1139, 0.0
        %vm1156 = vcmp.ge.f32.partialorder %v1152, 0.0
        %v1157 = vmul.f32 %v1139, 0.2
        %v1158 = vmul.f32 %v1152, 0.2
        %v1159 = vsel %vm1155, %v1139, %v1157
        %v1160 = vsel %vm1156, %v1152, %v1158
        %v1161 = vld [vmem:[%s1] sm:$0xff]
        %v1162 = vld [vmem:[%s1 + $0x8] sm:$0xff]
        %v1163 = vld [vmem:[%s1 + $0x10] sm:$0xff]
        %v1164 = vld [vmem:[%s1 + $0x18] sm:$0xff]
        %v1165 = vld [vmem:[%s1 + $0x20] sm:$0xff]
        %v1166 = vld [vmem:[%s1 + $0x28] sm:$0xff]
        %v1167 = vld [vmem:[%s1 + $0x30] sm:$0xff]
        %v1168 = vld [vmem:[%s1 + $0x38] sm:$0xff]
        %v1169 = vld [vmem:[%s1 + $0x40] sm:$0xff]
        %v1170 = vld [vmem:[%s1 + $0x48] sm:$0xff]
        %v1171 = vld [vmem:[%s1 + $0x50] sm:$0xff]
        %v1172 = vld [vmem:[%s1 + $0x58] sm:$0xff]
        %v1173 = vld [vmem:[%s1 + $0x60] sm:$0xff]
        %v1174 = vld [vmem:[%s1 + $0x68] sm:$0xff]
        %v1175 = vld [vmem:[%s1 + $0x70] sm:$0xff]
        %v1176 = vld [vmem:[%s1 + $0x78] sm:$0xff]
        %v1177 = vld [vmem:[%s1 + $0x80] sm:$0xff]
        %v1178 = vld [vmem:[%s1 + $0x88] sm:$0xff]
        %v1179 = vld [vmem:[%s1 + $0x90] sm:$0xff]
        %v1180 = vld [vmem:[%s1 + $0x98] sm:$0xff]
        %v1181 = vld [vmem:[%s1 + $0xa0] sm:$0xff]
        %v1182 = vld [vmem:[%s1 + $0xa8] sm:$0xff]
        %v1183 = vld [vmem:[%s1 + $0xb0] sm:$0xff]
        %v1184 = vld [vmem:[%s1 + $0xb8] sm:$0xff]
        %v1185 = vld [vmem:[%s1 + $0xc0] sm:$0xff]
        %v1186 = vld [vmem:[%s1 + $0xc8] sm:$0xff]
        %v1187 = vld [vmem:[%s1 + $0xd0] sm:$0xff]
        %v1188 = vld [vmem:[%s1 + $0xd8] sm:$0xff]
        %v1189 = vld [vmem:[%s1 + $0xe0] sm:$0xff]
        %v1190 = vld [vmem:[%s1 + $0xe8] sm:$0xff]
        %v1191 = vld [vmem:[%s1 + $0xf0] sm:$0xff]
        %v1192 = vld [vmem:[%s1 + $0xf8] sm:$0xff]
        %1193 = vmatpush.msra.mxu0 %v1176
        %1194 = vmatpush.msra.mxu0 %v1175
        %1195 = vmatpush.msra.mxu0 %v1174
        %1196 = vmatpush.msra.mxu0 %v1173
        %1197 = vmatpush.msra.mxu0 %v1172
        %1198 = vmatpush.msra.mxu0 %v1171
        %1199 = vmatpush.msra.mxu0 %v1170
        %1200 = vmatpush.msra.mxu0 %v1169
        %1201 = vmatpush.msra.mxu0 %v1168
        %1202 = vmatpush.msra.mxu0 %v1167
        %1203 = vmatpush.msra.mxu0 %v1166
        %1204 = vmatpush.msra.mxu0 %v1165
        %1205 = vmatpush.msra.mxu0 %v1164
        %1206 = vmatpush.msra.mxu0 %v1163
        %1207 = vmatpush.msra.mxu0 %v1162
        %1208 = vmatpush.msra.mxu0 %v1161
        %1209 = vmatmul.f32.gmra.mxu0 %v1159
        %v1210 = vpop.f32.mrf.mxu0
        %v1211 = vadd.f32 0.0, %v1210
        %1212 = vdwg.mxu0
        %1213 = vmatpush.msra.mxu0 %v1192
        %1214 = vmatpush.msra.mxu0 %v1191
        %1215 = vmatpush.msra.mxu0 %v1190
        %1216 = vmatpush.msra.mxu0 %v1189
        %1217 = vmatpush.msra.mxu0 %v1188
        %1218 = vmatpush.msra.mxu0 %v1187
        %1219 = vmatpush.msra.mxu0 %v1186
        %1220 = vmatpush.msra.mxu0 %v1185
        %1221 = vmatpush.msra.mxu0 %v1184
        %1222 = vmatpush.msra.mxu0 %v1183
        %1223 = vmatpush.msra.mxu0 %v1182
        %1224 = vmatpush.msra.mxu0 %v1181
        %1225 = vmatpush.msra.mxu0 %v1180
        %1226 = vmatpush.msra.mxu0 %v1179
        %1227 = vmatpush.msra.mxu0 %v1178
        %1228 = vmatpush.msra.mxu0 %v1177
        %1229 = vmatmul.f32.gmra.mxu0 %v1160
        %v1230 = vpop.f32.mrf.mxu0
        %v1231 = vadd.f32 %v1211, %v1230
        %1232 = vdwg.mxu0
        %vm1233 = vcmask 523264
        %v1234 = vsel %vm1233, %v1231, 0.0
        %1235 = vadd.xlane.f32.xlu0 %v1234
        %v1236 = vpop.xlane.xlu0 %1235
        %v1237 = vrcp.pop 64.0
        %v1238 = vmul.f32 64.0, %v1237
        %v1239 = vsub.f32 1.0, %v1238
        %v1240 = vmul.f32 %v1237, %v1239
        %v1241 = vadd.f32 %v1237, %v1240
        %vm1242 = vweird.f32 %v1237
        %v1243 = vsel %vm1242, %v1237, %v1241
        %v1244 = vmul.f32 %v1236, %v1243
        %v1245 = vsub.f32 %v1231, %v1244
        %v1246 = vmul.f32 %v1245, %v1245
        %v1247 = vsel %vm1233, %v1246, 0.0
        %1248 = vadd.xlane.f32.xlu0 %v1247
        %v1249 = vpop.xlane.xlu0 %1248
        %v1250 = vmul.f32 %v1249, %v1243
        %v1251 = vadd.f32 %v1250, 1e-08
        %v1252 = vrsqrt.pop %v1251
        %v1253 = vmul.f32 %v1252, %v1251
        %v1254 = vmul.f32 %v1253, %v1252
        %v1255 = vmul.f32 0.5, %v1254
        %v1256 = vsub.f32 1.5, %v1255
        %v1257 = vmul.f32 %v1252, %v1256
        %v1258 = vmul.f32 %v1251, %v1257
        %vm1259 = vcmp.eq.f32.partialorder %v1251, inf
        %v1260 = vsel %vm1259, %v1251, %v1258
        %vm1261 = vcmp.eq.f32.partialorder %v1251, 0.0
        %v1262 = vand.u32 %v1251, 2147483648
        %v1263 = vsel %vm1261, %v1262, %v1260
        %v1264 = vrcp.pop %v1263
        %v1265 = vmul.f32 %v1263, %v1264
        %v1266 = vsub.f32 1.0, %v1265
        %v1267 = vmul.f32 %v1264, %v1266
        %v1268 = vadd.f32 %v1264, %v1267
        %vm1269 = vweird.f32 %v1263
        %vm1270 = vweird.f32 %v1264
        %vm1271 = vmor %vm1269, %vm1270
        %v1272 = vsel %vm1271, %v1264, %v1268
        %v1273 = vand.u32 2147483647, %v1263
        %vm1274 = vcmp.eq.f32.partialorder %v1273, 8.507059e+37
        %v1275 = vand.u32 %v1263, 2147483648
        %v1276 = vor.u32 1.1754944e-38, %v1275
        %v1277 = vsel %vm1274, %v1276, %v1272
        %v1278 = vmul.f32 %v1245, %v1277
        %v1279 = vld [vmem:[%s9] sm:$0xff]
        %v1280 = vld [vmem:[%s9 + $0x8] sm:$0xff]
        %v1281 = vld [vmem:[%s10] sm:$0xff]
        %v1282 = vld [vmem:[%s10 + $0x8] sm:$0xff]
        %v1284 = vsel %vm854, %v1281, 0
        %v1287 = vsel %vm854, %v1282, 0
        %1289 = vmatpush.msra.mxu0 0.0
        %1290 = vmatpush.msra.mxu0 0.0
        %1291 = vmatpush.msra.mxu0 0.0
        %1292 = vmatpush.msra.mxu0 0.0
        %1293 = vmatpush.msra.mxu0 0.0
        %1294 = vmatpush.msra.mxu0 0.0
        %1295 = vmatpush.msra.mxu0 0.0
        %1296 = vmatpush.msra.mxu0 0.0
        %1297 = vmatpush.msra.mxu0 0.0
        %1298 = vmatpush.msra.mxu0 0.0
        %1299 = vmatpush.msra.mxu0 0.0
        %1300 = vmatpush.msra.mxu0 0.0
        %1301 = vmatpush.msra.mxu0 0.0
        %1302 = vmatpush.msra.mxu0 0.0
        %1303 = vmatpush.msra.mxu0 0.0
        %1304 = vmatpush.msra.mxu0 %v1263
        %1305 = vmatmul.f32.gmra.mxu0 %v1284
        %v1306 = vpop.f32.mrf.mxu0
        %v1307 = vadd.f32 0.0, %v1306
        %1308 = vmatmul.f32.gmra.mxu0 %v1287
        %v1309 = vpop.f32.mrf.mxu0
        %v1310 = vadd.f32 0.0, %v1309
        %1311 = vdwg.mxu0
        %v1313 = vsel %vm854, %v1279, 0
        %v1316 = vsel %vm854, %v1280, 0
        %1318 = vmatpush.msra.mxu0 0.0
        %1319 = vmatpush.msra.mxu0 0.0
        %1320 = vmatpush.msra.mxu0 0.0
        %1321 = vmatpush.msra.mxu0 0.0
        %1322 = vmatpush.msra.mxu0 0.0
        %1323 = vmatpush.msra.mxu0 0.0
        %1324 = vmatpush.msra.mxu0 0.0
        %1325 = vmatpush.msra.mxu0 0.0
        %1326 = vmatpush.msra.mxu0 0.0
        %1327 = vmatpush.msra.mxu0 0.0
        %1328 = vmatpush.msra.mxu0 0.0
        %1329 = vmatpush.msra.mxu0 0.0
        %1330 = vmatpush.msra.mxu0 0.0
        %1331 = vmatpush.msra.mxu0 0.0
        %1332 = vmatpush.msra.mxu0 0.0
        %1333 = vmatpush.msra.mxu0 %v1244
        %1334 = vmatmul.f32.gmra.mxu0 %v1313
        %v1335 = vpop.f32.mrf.mxu0
        %v1336 = vadd.f32 %v1307, %v1335
        %1337 = vmatmul.f32.gmra.mxu0 %v1316
        %v1338 = vpop.f32.mrf.mxu0
        %v1339 = vadd.f32 %v1310, %v1338
        %1340 = vdwg.mxu0
        %v1341 = vld [vmem:[%s11] sm:$0xff]
        %v1342 = vld [vmem:[%s11 + $0x8] sm:$0xff]
        %v1343 = vadd.f32 %v1336, %v1341
        %v1344 = vadd.f32 %v1339, %v1342
        %1345 = vst.msk [vmem:[%s434] sm:$0xff] %vm1233, %v1278
        %1346 = vst.msk [vmem:[%s451] sm:$0xff] %vm607, %v915
        %1347 = vst.msk [vmem:[%s451 + $0x8] sm:$0xff] %vm607, %v916
        %s1348 = scalar_lea.vmem %s451, 16
        %1349 = vst.msk [vmem:[%s1348] sm:$0xff] %vm607, %v1343
        %1350 = vst.msk [vmem:[%s1348 + $0x8] sm:$0xff] %vm607, %v1344
        %s1351 = sand.u32 %s293, 1
        %s1352 = scalar_lea.sflag [#allocation5], %s1351
        %s1353 = sand.u32 %s293, 1
        %s1354 = smul.addr %s1353, 8
        %s1355 = scalar_lea.vmem [#allocation4], %s1354
        %p1356 = scmp.lt.s32.totalorder %s28, 1
        %s1357 = scalar_select %p1356, %s28, 1
        %s1358 = smul.addr %s1357, 4
        %s1359 = smul.addr %s1358, 8
        %s1360 = scalar_lea.vmem %s13, %s1359
        // Predicated region
        $region69: #{tpu_custom_call.1} parent=67 // pred_check
          %p1361 = pneg %p303
        $region70: #{tpu_custom_call.1} parent=67 // pred_check_branch
          %1363 = sbr.rel (%p1361) target = $region72
        $region71: #{tpu_custom_call.1} parent=67 // pred_region
          %1365 = vsyncadd %s1352, 0
          %s1366 = smul.addr %s28, 8
          %s1367 = scalar_lea.hbm %s12, %s1366
          %s1369 = sshll.u32 %s1355, 4
          %s1370 = int_to_ptr.vmem [resolvable:$true] %s1369
          %s1371 = sshll.u32 %s1367, 4
          %s1372 = int_to_ptr.hbm [resolvable:$true] %s1371
          %1374 = dma.vmem_to_hbm [thread:$0]  %s1370, 128, %s1372, %s1352
        $region72: #{tpu_custom_call.1} parent=67 // pred_fallthru
          _
        // Predicated region
        $region73: #{tpu_custom_call.1} parent=67 // pred_check
          %p1375 = pneg %p329
        $region74: #{tpu_custom_call.1} parent=67 // pred_check_branch
          %1377 = sbr.rel (%p1375) target = $region76
        $region75: #{tpu_custom_call.1} parent=67 // pred_region
          _
        $region76: #{tpu_custom_call.1} parent=67 // pred_fallthru
          _
      $region68: #{tpu_custom_call.1} parent=5 // pred_fallthru
        _
      %p1378 = scmp.le.s32.totalorder 2, %s23
      // Predicated region
      $region77: #{tpu_custom_call.1} parent=5 // pred_check
        %p1379 = pneg %p1378
      $region78: #{tpu_custom_call.1} parent=5 // pred_check_branch
        %1381 = sbr.rel (%p1379) target = $region80
      $region79: #{tpu_custom_call.1} parent=5 // pred_region
        %s1382 = ssub.s32 %s23, 2
        // Predicated region
        $region81: #{tpu_custom_call.1} parent=79 // pred_check
          %p1383 = pneg %p309
        $region82: #{tpu_custom_call.1} parent=79 // pred_check_branch
          %1385 = sbr.rel (%p1383) target = $region84
        $region83: #{tpu_custom_call.1} parent=79 // pred_region
          %s1386 = sand.u32 %s294, 1
          %s1387 = scalar_lea.sflag [#allocation5], %s1386
          %s1388 = sand.u32 %s294, 1
          %s1389 = smul.addr %s1388, 8
          %s1390 = scalar_lea.vmem [#allocation4], %s1389
          %1392 = dma.done %s1387, 128
        $region84: #{tpu_custom_call.1} parent=79 // pred_fallthru
          _
        // Predicated region
        $region85: #{tpu_custom_call.1} parent=79 // pred_check
          %p1393 = pneg %p335
        $region86: #{tpu_custom_call.1} parent=79 // pred_check_branch
          %1395 = sbr.rel (%p1393) target = $region88
        $region87: #{tpu_custom_call.1} parent=79 // pred_region
          %p1396 = scmp.lt.s32.totalorder %s29, 1
          %s1397 = scalar_select %p1396, %s29, 1
          %s1398 = smul.addr %s1397, 4
          %s1399 = smul.addr %s1398, 8
          %s1400 = scalar_lea.vmem %s13, %s1399
        $region88: #{tpu_custom_call.1} parent=79 // pred_fallthru
          _
      $region80: #{tpu_custom_call.1} parent=5 // pred_fallthru
        _
    $region6: #{tpu_custom_call.1} parent=1 // loop_footer
      %s27 = sadd.s32 1, %s23
    $region7: #{tpu_custom_call.1} parent=1 // loop_footer_branch
      %22 = sbr.rel target = $region3
    $region8: #{tpu_custom_call.1} parent=1 // loop_exit
      _
    %1401 = vsyncpa [#allocation5], 1
    %s1402 = scalar_lea.sflag [#allocation5], 1
    %1403 = vsyncpa %s1402, 1

</llo_original>
